<compile_context>
chip_gen: v7x
topology: tpu7x:2x2x1
jax: 0.10.0
libtpu: 0.0.40
codegen_flags: <defaults>
</compile_context>

<pallas_src>
import functools

import jax
import jax.numpy as jnp
from jax.experimental import pallas as pl
from jax.experimental.pallas import tpu as pltpu


# Set to jnp.bfloat16 on v6e/v7x for ~2x MXU throughput (accumulation stays
# f32 via preferred_element_type). f32 keeps exact parity with the PyTorch
# reference, so it is the default here.
MXU_DTYPE = jnp.float32


def _mxu_dot(a, b):
    return jnp.dot(a.astype(MXU_DTYPE), b.astype(MXU_DTYPE),
                   preferred_element_type=jnp.float32)


# ----------------------------------------------------------------------------
# Fused SDCN forward kernel (everything resident in VMEM, grid-less)
# ----------------------------------------------------------------------------

def _sdcn_fused_kernel(
    # data
    x_ref, y_ref, adj_ref, m_ref,
    # AE params: weights stored (in, out), biases (1, out)
    we1_ref, be1_ref, we2_ref, be2_ref, wz_ref, bz_ref,
    wd1_ref, bd1_ref, wd2_ref, bd2_ref, wxb_ref, bxb_ref,
    # GAT params: W (in, out), a_pair (out, 2) = [a_self | a_neigh]
    g1w_ref, g1a_ref, g2w_ref, g2a_ref, g3w_ref, g3a_ref, g4w_ref, g4a_ref,
    # cluster centers, pre-transposed to (n_z, n_clusters)
    clu_t_ref,
    # outputs
    xbar_ref, q_ref, pred_ref, zf_ref,
    *, alpha, v, sigma,
):
    f32 = jnp.float32

    def linear(xv, w_ref, b_ref, relu):
        yv = _mxu_dot(xv, w_ref[...]) + b_ref[...]
        return jnp.maximum(yv, 0.0) if relu else yv

    # ---------------- autoencoder ----------------
    xv = x_ref[...]
    enc_h1 = linear(xv, we1_ref, be1_ref, True)
    enc_h2 = linear(enc_h1, we2_ref, be2_ref, True)
    z = linear(enc_h2, wz_ref, bz_ref, False)
    dec_h1 = linear(z, wd1_ref, bd1_ref, True)
    dec_h2 = linear(dec_h1, wd2_ref, bd2_ref, True)
    xbar_ref[...] = linear(dec_h2, wxb_ref, bxb_ref, False)

    # ---------------- GAT stack ----------------
    # adjacency mask and M: computed / loaded once, reused by all 4 layers.
    adj_mask = adj_ref[...] > 0.0
    m_mat = m_ref[...]
    neg_big = f32(-9e15)

    def gat(xin, w_ref, a_ref):
        h = _mxu_dot(xin, w_ref[...])                       # (N, F)
        attn = _mxu_dot(h, a_ref[...])                      # (N, 2) on the MXU
        attn_dense = attn[:, 0:1] + attn[:, 1:2].T          # (N, N)
        attn_dense = attn_dense * m_mat
        # LeakyReLU(alpha)
        attn_dense = jnp.where(attn_dense > 0, attn_dense, alpha * attn_dense)
        logits = jnp.where(adj_mask, attn_dense, neg_big)
        # row softmax (dim=1)
        logits = logits - jnp.max(logits, axis=1, keepdims=True)
        e = jnp.exp(logits)
        attention = e / jnp.sum(e, axis=1, keepdims=True)
        hp = _mxu_dot(attention, h)                         # (N, F)
        # ELU(alpha=1); clamp exp argument so the unselected branch stays finite.
        return jnp.where(hp > 0, hp, jnp.exp(jnp.minimum(hp, 0.0)) - 1.0)

    h1 = gat(y_ref[...], g1w_ref, g1a_ref)
    h2 = gat((1.0 - sigma) * h1 + sigma * enc_h1, g2w_ref, g2a_ref)
    h3 = gat((1.0 - sigma) * h2 + sigma * enc_h2, g3w_ref, g3a_ref)
    zf = (1.0 - sigma) * h3 + sigma * z
    zf_ref[...] = zf
    h4 = gat(zf, g4w_ref, g4a_ref)                          # reuse zf (no recompute)

    # ---------------- predict = row-softmax(h4) ----------------
    p = h4 - jnp.max(h4, axis=1, keepdims=True)
    pe = jnp.exp(p)
    pred_ref[...] = pe / jnp.sum(pe, axis=1, keepdims=True)

    # ---------------- student-t q (MXU form) ----------------
    # ||z - c||^2 = ||z||^2 + ||c||^2 - 2 z @ c^T
    clu_t = clu_t_ref[...]                                   # (n_z, K)
    z_sq = jnp.sum(z * z, axis=1, keepdims=True)             # (N, 1)
    c_sq = jnp.sum(clu_t * clu_t, axis=0, keepdims=True)     # (1, K)
    zc = _mxu_dot(z, clu_t)                                  # (N, K)
    dist2 = jnp.maximum(z_sq + c_sq - 2.0 * zc, 0.0)
    q = 1.0 / (1.0 + dist2 / v)
    if v != 1.0:                                             # exponent is 1 when v==1
        q = q ** ((v + 1.0) / 2.0)
    q_ref[...] = q / jnp.sum(q, axis=1, keepdims=True)


# ----------------------------------------------------------------------------
# Wrapper: one pallas_call for the whole forward pass
# ----------------------------------------------------------------------------

def sdcn_forward(params, x, y, adj, M, *, alpha=0.2, v=1.0, sigma=0.5):
    n, n_input = x.shape
    n_z = params["z_layer"][0].shape[1]
    n_clusters = params["cluster_layer_t"].shape[1]

    inputs = (
        x, y, adj, M,
        *params["enc_1"], *params["enc_2"], *params["z_layer"],
        *params["dec_1"], *params["dec_2"], *params["x_bar_layer"],
        *params["gnn_1"], *params["gnn_2"], *params["gnn_3"], *params["gnn_4"],
        params["cluster_layer_t"],
    )

    def vmem_spec():
        return pl.BlockSpec(memory_space=pltpu.MemorySpace.VMEM)

    out_shape = (
        jax.ShapeDtypeStruct((n, n_input), jnp.float32),     # x_bar
        jax.ShapeDtypeStruct((n, n_clusters), jnp.float32),  # q
        jax.ShapeDtypeStruct((n, n_clusters), jnp.float32),  # predict
        jax.ShapeDtypeStruct((n, n_z), jnp.float32),         # zf
    )

    return pl.pallas_call(
        functools.partial(_sdcn_fused_kernel,
                          alpha=float(alpha), v=float(v), sigma=float(sigma)),
        out_shape=out_shape,
        in_specs=[vmem_spec() for _ in inputs],
        out_specs=tuple(vmem_spec() for _ in out_shape),
        compiler_params=pltpu.CompilerParams(
            vmem_limit_bytes=32 * 1024 * 1024),
    )(*inputs)


# ----------------------------------------------------------------------------
# Parameter construction (deterministic, synthetic — no checkpoint loading)
# ----------------------------------------------------------------------------

def make_params(key, n_enc_1, n_enc_2, n_dec_1, n_dec_2, n_input, n_time, n_z,
                n_clusters):
    keys = iter(jax.random.split(key, 40))

    def lin(n_in, n_out):
        # weight stored (in, out) so the kernel does x @ W; bias as (1, out)
        w = jax.random.normal(next(keys), (n_in, n_out), jnp.float32) * 0.1
        b = jax.random.normal(next(keys), (1, n_out), jnp.float32) * 0.01
        return w, b

    def gat(n_in, n_out):
        w = jax.random.normal(next(keys), (n_in, n_out), jnp.float32) * 0.1
        a_self = jax.random.normal(next(keys), (n_out, 1), jnp.float32) * 0.1
        a_neigh = jax.random.normal(next(keys), (n_out, 1), jnp.float32) * 0.1
        # fold both attention projections into one (out, 2) MXU operand
        return w, jnp.concatenate([a_self, a_neigh], axis=1)

    return {
        "enc_1": lin(n_input, n_enc_1),
        "enc_2": lin(n_enc_1, n_enc_2),
        "z_layer": lin(n_enc_2, n_z),
        "dec_1": lin(n_z, n_dec_1),
        "dec_2": lin(n_dec_1, n_dec_2),
        "x_bar_layer": lin(n_dec_2, n_input),
        "gnn_1": gat(n_time, n_enc_1),
        "gnn_2": gat(n_enc_1, n_enc_2),
        "gnn_3": gat(n_enc_2, n_z),
        "gnn_4": gat(n_z, n_clusters),
        # stored pre-transposed: (n_z, n_clusters) -> no transpose in kernel
        "cluster_layer_t": jax.random.normal(next(keys), (n_z, n_clusters),
                                             jnp.float32),
    }


# ----------------------------------------------------------------------------
# Main
# ----------------------------------------------------------------------------

if __name__ == "__main__":
    # small synthetic sizes
    N = 8            # number of nodes
    n_input = 32
    n_time = 16
    n_enc_1 = n_dec_2 = 16
    n_enc_2 = n_dec_1 = 16
    n_z = 8
    n_clusters = 4
    alpha = 0.2
    v = 1.0

    key = jax.random.PRNGKey(0)
    k_par, k_x, k_y, k_adj, k_m = jax.random.split(key, 5)

    params = make_params(k_par, n_enc_1, n_enc_2, n_dec_1, n_dec_2,
                         n_input, n_time, n_z, n_clusters)

    x = jax.random.normal(k_x, (N, n_input), jnp.float32)
    y = jax.random.normal(k_y, (N, n_time), jnp.float32)
    # random symmetric adjacency with self-loops
    a = (jax.random.uniform(k_adj, (N, N)) > 0.5).astype(jnp.float32)
    adj = jnp.clip(a + a.T + jnp.eye(N, dtype=jnp.float32), 0.0, 1.0)
    M = jax.random.uniform(k_m, (N, N), jnp.float32)

    x_bar, q, predict, zf = sdcn_forward(params, x, y, adj, M, alpha=alpha, v=v)
    jax.block_until_ready((x_bar, q, predict, zf))

    assert x_bar.shape == (N, n_input)
    assert q.shape == (N, n_clusters)
    assert predict.shape == (N, n_clusters)
    assert zf.shape == (N, n_z)
    assert bool(jnp.all(jnp.isfinite(x_bar)))
    assert bool(jnp.all(jnp.isfinite(q)))
    assert bool(jnp.all(jnp.isfinite(predict)))
    assert bool(jnp.all(jnp.isfinite(zf)))

    print("KERNEL_OK")
</pallas_src>

<mosaic_0001>
module attributes {stable_mosaic.version = 11 : i64} {
  func.func @_sdcn_fused_kernel(%arg0: memref<8x32xf32, #tpu.memory_space<vmem>>, %arg1: memref<8x16xf32, #tpu.memory_space<vmem>>, %arg2: memref<8x8xf32, #tpu.memory_space<vmem>>, %arg3: memref<8x8xf32, #tpu.memory_space<vmem>>, %arg4: memref<32x16xf32, #tpu.memory_space<vmem>>, %arg5: memref<1x16xf32, #tpu.memory_space<vmem>>, %arg6: memref<16x16xf32, #tpu.memory_space<vmem>>, %arg7: memref<1x16xf32, #tpu.memory_space<vmem>>, %arg8: memref<16x8xf32, #tpu.memory_space<vmem>>, %arg9: memref<1x8xf32, #tpu.memory_space<vmem>>, %arg10: memref<8x16xf32, #tpu.memory_space<vmem>>, %arg11: memref<1x16xf32, #tpu.memory_space<vmem>>, %arg12: memref<16x16xf32, #tpu.memory_space<vmem>>, %arg13: memref<1x16xf32, #tpu.memory_space<vmem>>, %arg14: memref<16x32xf32, #tpu.memory_space<vmem>>, %arg15: memref<1x32xf32, #tpu.memory_space<vmem>>, %arg16: memref<16x16xf32, #tpu.memory_space<vmem>>, %arg17: memref<16x2xf32, #tpu.memory_space<vmem>>, %arg18: memref<16x16xf32, #tpu.memory_space<vmem>>, %arg19: memref<16x2xf32, #tpu.memory_space<vmem>>, %arg20: memref<16x8xf32, #tpu.memory_space<vmem>>, %arg21: memref<8x2xf32, #tpu.memory_space<vmem>>, %arg22: memref<8x4xf32, #tpu.memory_space<vmem>>, %arg23: memref<4x2xf32, #tpu.memory_space<vmem>>, %arg24: memref<8x4xf32, #tpu.memory_space<vmem>>, %arg25: memref<8x32xf32, #tpu.memory_space<vmem>>, %arg26: memref<8x4xf32, #tpu.memory_space<vmem>>, %arg27: memref<8x4xf32, #tpu.memory_space<vmem>>, %arg28: memref<8x8xf32, #tpu.memory_space<vmem>>) attributes {dimension_semantics = [], scalar_prefetch = 0 : i64, scratch_operands = 0 : i64, tpu.core_type = #tpu.core_type<tc>} {
    %c0 = arith.constant 0 : index
    %c0_0 = arith.constant 0 : index
    %0 = vector.load %arg0[%c0, %c0_0] : memref<8x32xf32, #tpu.memory_space<vmem>>, vector<8x32xf32>
    %c0_1 = arith.constant 0 : index
    %c0_2 = arith.constant 0 : index
    %1 = vector.load %arg4[%c0_1, %c0_2] : memref<32x16xf32, #tpu.memory_space<vmem>>, vector<32x16xf32>
    %cst = arith.constant dense<0.000000e+00> : vector<8x16xf32>
    %2 = tpu.matmul %0, %1, %cst {dimension_numbers = #tpu.dot_dimension_numbers<[1], [0], [0], [1], [0, 0, 1, 1], [], []>} : vector<8x32xf32>, vector<32x16xf32>, vector<8x16xf32> -> vector<8x16xf32>
    %c0_3 = arith.constant 0 : index
    %c0_4 = arith.constant 0 : index
    %3 = vector.load %arg5[%c0_3, %c0_4] : memref<1x16xf32, #tpu.memory_space<vmem>>, vector<1x16xf32>
    %4 = vector.broadcast %3 : vector<1x16xf32> to vector<8x16xf32>
    %5 = arith.addf %2, %4 : vector<8x16xf32>
    %cst_5 = arith.constant 0.000000e+00 : f32
    %6 = vector.broadcast %cst_5 : f32 to vector<8x16xf32>
    %7 = arith.maximumf %5, %6 : vector<8x16xf32>
    %c0_6 = arith.constant 0 : index
    %c0_7 = arith.constant 0 : index
    %8 = vector.load %arg6[%c0_6, %c0_7] : memref<16x16xf32, #tpu.memory_space<vmem>>, vector<16x16xf32>
    %cst_8 = arith.constant dense<0.000000e+00> : vector<8x16xf32>
    %9 = tpu.matmul %7, %8, %cst_8 {dimension_numbers = #tpu.dot_dimension_numbers<[1], [0], [0], [1], [0, 0, 1, 1], [], []>} : vector<8x16xf32>, vector<16x16xf32>, vector<8x16xf32> -> vector<8x16xf32>
    %c0_9 = arith.constant 0 : index
    %c0_10 = arith.constant 0 : index
    %10 = vector.load %arg7[%c0_9, %c0_10] : memref<1x16xf32, #tpu.memory_space<vmem>>, vector<1x16xf32>
    %11 = vector.broadcast %10 : vector<1x16xf32> to vector<8x16xf32>
    %12 = arith.addf %9, %11 : vector<8x16xf32>
    %cst_11 = arith.constant 0.000000e+00 : f32
    %13 = vector.broadcast %cst_11 : f32 to vector<8x16xf32>
    %14 = arith.maximumf %12, %13 : vector<8x16xf32>
    %c0_12 = arith.constant 0 : index
    %c0_13 = arith.constant 0 : index
    %15 = vector.load %arg8[%c0_12, %c0_13] : memref<16x8xf32, #tpu.memory_space<vmem>>, vector<16x8xf32>
    %cst_14 = arith.constant dense<0.000000e+00> : vector<8x8xf32>
    %16 = tpu.matmul %14, %15, %cst_14 {dimension_numbers = #tpu.dot_dimension_numbers<[1], [0], [0], [1], [0, 0, 1, 1], [], []>} : vector<8x16xf32>, vector<16x8xf32>, vector<8x8xf32> -> vector<8x8xf32>
    %c0_15 = arith.constant 0 : index
    %c0_16 = arith.constant 0 : index
    %17 = vector.load %arg9[%c0_15, %c0_16] : memref<1x8xf32, #tpu.memory_space<vmem>>, vector<1x8xf32>
    %18 = vector.broadcast %17 : vector<1x8xf32> to vector<8x8xf32>
    %19 = arith.addf %16, %18 : vector<8x8xf32>
    %c0_17 = arith.constant 0 : index
    %c0_18 = arith.constant 0 : index
    %20 = vector.load %arg10[%c0_17, %c0_18] : memref<8x16xf32, #tpu.memory_space<vmem>>, vector<8x16xf32>
    %cst_19 = arith.constant dense<0.000000e+00> : vector<8x16xf32>
    %21 = tpu.matmul %19, %20, %cst_19 {dimension_numbers = #tpu.dot_dimension_numbers<[1], [0], [0], [1], [0, 0, 1, 1], [], []>} : vector<8x8xf32>, vector<8x16xf32>, vector<8x16xf32> -> vector<8x16xf32>
    %c0_20 = arith.constant 0 : index
    %c0_21 = arith.constant 0 : index
    %22 = vector.load %arg11[%c0_20, %c0_21] : memref<1x16xf32, #tpu.memory_space<vmem>>, vector<1x16xf32>
    %23 = vector.broadcast %22 : vector<1x16xf32> to vector<8x16xf32>
    %24 = arith.addf %21, %23 : vector<8x16xf32>
    %cst_22 = arith.constant 0.000000e+00 : f32
    %25 = vector.broadcast %cst_22 : f32 to vector<8x16xf32>
    %26 = arith.maximumf %24, %25 : vector<8x16xf32>
    %c0_23 = arith.constant 0 : index
    %c0_24 = arith.constant 0 : index
    %27 = vector.load %arg12[%c0_23, %c0_24] : memref<16x16xf32, #tpu.memory_space<vmem>>, vector<16x16xf32>
    %cst_25 = arith.constant dense<0.000000e+00> : vector<8x16xf32>
    %28 = tpu.matmul %26, %27, %cst_25 {dimension_numbers = #tpu.dot_dimension_numbers<[1], [0], [0], [1], [0, 0, 1, 1], [], []>} : vector<8x16xf32>, vector<16x16xf32>, vector<8x16xf32> -> vector<8x16xf32>
    %c0_26 = arith.constant 0 : index
    %c0_27 = arith.constant 0 : index
    %29 = vector.load %arg13[%c0_26, %c0_27] : memref<1x16xf32, #tpu.memory_space<vmem>>, vector<1x16xf32>
    %30 = vector.broadcast %29 : vector<1x16xf32> to vector<8x16xf32>
    %31 = arith.addf %28, %30 : vector<8x16xf32>
    %cst_28 = arith.constant 0.000000e+00 : f32
    %32 = vector.broadcast %cst_28 : f32 to vector<8x16xf32>
    %33 = arith.maximumf %31, %32 : vector<8x16xf32>
    %c0_29 = arith.constant 0 : index
    %c0_30 = arith.constant 0 : index
    %34 = vector.load %arg14[%c0_29, %c0_30] : memref<16x32xf32, #tpu.memory_space<vmem>>, vector<16x32xf32>
    %cst_31 = arith.constant dense<0.000000e+00> : vector<8x32xf32>
    %35 = tpu.matmul %33, %34, %cst_31 {dimension_numbers = #tpu.dot_dimension_numbers<[1], [0], [0], [1], [0, 0, 1, 1], [], []>} : vector<8x16xf32>, vector<16x32xf32>, vector<8x32xf32> -> vector<8x32xf32>
    %c0_32 = arith.constant 0 : index
    %c0_33 = arith.constant 0 : index
    %36 = vector.load %arg15[%c0_32, %c0_33] : memref<1x32xf32, #tpu.memory_space<vmem>>, vector<1x32xf32>
    %37 = vector.broadcast %36 : vector<1x32xf32> to vector<8x32xf32>
    %38 = arith.addf %35, %37 : vector<8x32xf32>
    %c0_34 = arith.constant 0 : index
    %c0_35 = arith.constant 0 : index
    %39 = vector.load %arg25[%c0_34, %c0_35] : memref<8x32xf32, #tpu.memory_space<vmem>>, vector<8x32xf32>
    tpu.vector_store %arg25[%c0_34, %c0_35], %38 {strides = array<i32>} : memref<8x32xf32, #tpu.memory_space<vmem>>, vector<8x32xf32>,
    %c0_36 = arith.constant 0 : index
    %c0_37 = arith.constant 0 : index
    %40 = vector.load %arg2[%c0_36, %c0_37] : memref<8x8xf32, #tpu.memory_space<vmem>>, vector<8x8xf32>
    %cst_38 = arith.constant 0.000000e+00 : f32
    %41 = vector.broadcast %cst_38 : f32 to vector<8x8xf32>
    %42 = arith.cmpf ogt, %40, %41 : vector<8x8xf32>
    %c0_39 = arith.constant 0 : index
    %c0_40 = arith.constant 0 : index
    %43 = vector.load %arg3[%c0_39, %c0_40] : memref<8x8xf32, #tpu.memory_space<vmem>>, vector<8x8xf32>
    %c0_41 = arith.constant 0 : index
    %c0_42 = arith.constant 0 : index
    %44 = vector.load %arg1[%c0_41, %c0_42] : memref<8x16xf32, #tpu.memory_space<vmem>>, vector<8x16xf32>
    %c0_43 = arith.constant 0 : index
    %c0_44 = arith.constant 0 : index
    %45 = vector.load %arg16[%c0_43, %c0_44] : memref<16x16xf32, #tpu.memory_space<vmem>>, vector<16x16xf32>
    %cst_45 = arith.constant dense<0.000000e+00> : vector<8x16xf32>
    %46 = tpu.matmul %44, %45, %cst_45 {dimension_numbers = #tpu.dot_dimension_numbers<[1], [0], [0], [1], [0, 0, 1, 1], [], []>} : vector<8x16xf32>, vector<16x16xf32>, vector<8x16xf32> -> vector<8x16xf32>
    %c0_46 = arith.constant 0 : index
    %c0_47 = arith.constant 0 : index
    %47 = vector.load %arg17[%c0_46, %c0_47] : memref<16x2xf32, #tpu.memory_space<vmem>>, vector<16x2xf32>
    %cst_48 = arith.constant dense<0.000000e+00> : vector<8x2xf32>
    %48 = tpu.matmul %46, %47, %cst_48 {dimension_numbers = #tpu.dot_dimension_numbers<[1], [0], [0], [1], [0, 0, 1, 1], [], []>} : vector<8x16xf32>, vector<16x2xf32>, vector<8x2xf32> -> vector<8x2xf32>
    %49 = vector.extract_strided_slice %48 {offsets = [0, 0], sizes = [8, 1], strides = [1, 1]} : vector<8x2xf32> to vector<8x1xf32>
    %50 = vector.extract_strided_slice %48 {offsets = [0, 1], sizes = [8, 1], strides = [1, 1]} : vector<8x2xf32> to vector<8x1xf32>
    %51 = tpu.transpose %50, [1, 0] : vector<8x1xf32> -> vector<1x8xf32>
    %52 = vector.broadcast %49 : vector<8x1xf32> to vector<8x8xf32>
    %53 = vector.broadcast %51 : vector<1x8xf32> to vector<8x8xf32>
    %54 = arith.addf %52, %53 : vector<8x8xf32>
    %55 = arith.mulf %54, %43 : vector<8x8xf32>
    %cst_49 = arith.constant 0.000000e+00 : f32
    %56 = vector.broadcast %cst_49 : f32 to vector<8x8xf32>
    %57 = arith.cmpf ogt, %55, %56 : vector<8x8xf32>
    %cst_50 = arith.constant 2.000000e-01 : f32
    %58 = vector.broadcast %cst_50 : f32 to vector<8x8xf32>
    %59 = arith.mulf %58, %55 : vector<8x8xf32>
    %60 = arith.select %57, %55, %59 : vector<8x8xi1>, vector<8x8xf32>
    %cst_51 = arith.constant -9.000000e+15 : f32
    %61 = vector.broadcast %cst_51 : f32 to vector<8x8xf32>
    %62 = arith.select %42, %60, %61 : vector<8x8xi1>, vector<8x8xf32>
    %cst_52 = arith.constant dense<0xFF800000> : vector<8xf32>
    %63 = vector.multi_reduction <maximumf>, %62, %cst_52 [1] : vector<8x8xf32> to vector<8xf32>
    %64 = vector.shape_cast %63 : vector<8xf32> to vector<8x1xf32>
    %65 = vector.broadcast %64 : vector<8x1xf32> to vector<8x8xf32>
    %66 = arith.subf %62, %65 : vector<8x8xf32>
    %67 = math.exp %66 : vector<8x8xf32>
    %cst_53 = arith.constant dense<0.000000e+00> : vector<8xf32>
    %68 = vector.multi_reduction <add>, %67, %cst_53 [1] : vector<8x8xf32> to vector<8xf32>
    %69 = vector.shape_cast %68 : vector<8xf32> to vector<8x1xf32>
    %70 = vector.broadcast %69 : vector<8x1xf32> to vector<8x8xf32>
    %71 = arith.divf %67, %70 : vector<8x8xf32>
    %cst_54 = arith.constant dense<0.000000e+00> : vector<8x16xf32>
    %72 = tpu.matmul %71, %46, %cst_54 {dimension_numbers = #tpu.dot_dimension_numbers<[1], [0], [0], [1], [0, 0, 1, 1], [], []>} : vector<8x8xf32>, vector<8x16xf32>, vector<8x16xf32> -> vector<8x16xf32>
    %cst_55 = arith.constant 0.000000e+00 : f32
    %73 = vector.broadcast %cst_55 : f32 to vector<8x16xf32>
    %74 = arith.cmpf ogt, %72, %73 : vector<8x16xf32>
    %cst_56 = arith.constant 0.000000e+00 : f32
    %75 = vector.broadcast %cst_56 : f32 to vector<8x16xf32>
    %76 = arith.minimumf %72, %75 : vector<8x16xf32>
    %77 = math.exp %76 : vector<8x16xf32>
    %cst_57 = arith.constant 1.000000e+00 : f32
    %78 = vector.broadcast %cst_57 : f32 to vector<8x16xf32>
    %79 = arith.subf %77, %78 : vector<8x16xf32>
    %80 = arith.select %74, %72, %79 : vector<8x16xi1>, vector<8x16xf32>
    %cst_58 = arith.constant 5.000000e-01 : f32
    %81 = vector.broadcast %cst_58 : f32 to vector<8x16xf32>
    %82 = arith.mulf %81, %80 : vector<8x16xf32>
    %cst_59 = arith.constant 5.000000e-01 : f32
    %83 = vector.broadcast %cst_59 : f32 to vector<8x16xf32>
    %84 = arith.mulf %83, %7 : vector<8x16xf32>
    %85 = arith.addf %82, %84 : vector<8x16xf32>
    %c0_60 = arith.constant 0 : index
    %c0_61 = arith.constant 0 : index
    %86 = vector.load %arg18[%c0_60, %c0_61] : memref<16x16xf32, #tpu.memory_space<vmem>>, vector<16x16xf32>
    %cst_62 = arith.constant dense<0.000000e+00> : vector<8x16xf32>
    %87 = tpu.matmul %85, %86, %cst_62 {dimension_numbers = #tpu.dot_dimension_numbers<[1], [0], [0], [1], [0, 0, 1, 1], [], []>} : vector<8x16xf32>, vector<16x16xf32>, vector<8x16xf32> -> vector<8x16xf32>
    %c0_63 = arith.constant 0 : index
    %c0_64 = arith.constant 0 : index
    %88 = vector.load %arg19[%c0_63, %c0_64] : memref<16x2xf32, #tpu.memory_space<vmem>>, vector<16x2xf32>
    %cst_65 = arith.constant dense<0.000000e+00> : vector<8x2xf32>
    %89 = tpu.matmul %87, %88, %cst_65 {dimension_numbers = #tpu.dot_dimension_numbers<[1], [0], [0], [1], [0, 0, 1, 1], [], []>} : vector<8x16xf32>, vector<16x2xf32>, vector<8x2xf32> -> vector<8x2xf32>
    %90 = vector.extract_strided_slice %89 {offsets = [0, 0], sizes = [8, 1], strides = [1, 1]} : vector<8x2xf32> to vector<8x1xf32>
    %91 = vector.extract_strided_slice %89 {offsets = [0, 1], sizes = [8, 1], strides = [1, 1]} : vector<8x2xf32> to vector<8x1xf32>
    %92 = tpu.transpose %91, [1, 0] : vector<8x1xf32> -> vector<1x8xf32>
    %93 = vector.broadcast %90 : vector<8x1xf32> to vector<8x8xf32>
    %94 = vector.broadcast %92 : vector<1x8xf32> to vector<8x8xf32>
    %95 = arith.addf %93, %94 : vector<8x8xf32>
    %96 = arith.mulf %95, %43 : vector<8x8xf32>
    %cst_66 = arith.constant 0.000000e+00 : f32
    %97 = vector.broadcast %cst_66 : f32 to vector<8x8xf32>
    %98 = arith.cmpf ogt, %96, %97 : vector<8x8xf32>
    %cst_67 = arith.constant 2.000000e-01 : f32
    %99 = vector.broadcast %cst_67 : f32 to vector<8x8xf32>
    %100 = arith.mulf %99, %96 : vector<8x8xf32>
    %101 = arith.select %98, %96, %100 : vector<8x8xi1>, vector<8x8xf32>
    %cst_68 = arith.constant -9.000000e+15 : f32
    %102 = vector.broadcast %cst_68 : f32 to vector<8x8xf32>
    %103 = arith.select %42, %101, %102 : vector<8x8xi1>, vector<8x8xf32>
    %cst_69 = arith.constant dense<0xFF800000> : vector<8xf32>
    %104 = vector.multi_reduction <maximumf>, %103, %cst_69 [1] : vector<8x8xf32> to vector<8xf32>
    %105 = vector.shape_cast %104 : vector<8xf32> to vector<8x1xf32>
    %106 = vector.broadcast %105 : vector<8x1xf32> to vector<8x8xf32>
    %107 = arith.subf %103, %106 : vector<8x8xf32>
    %108 = math.exp %107 : vector<8x8xf32>
    %cst_70 = arith.constant dense<0.000000e+00> : vector<8xf32>
    %109 = vector.multi_reduction <add>, %108, %cst_70 [1] : vector<8x8xf32> to vector<8xf32>
    %110 = vector.shape_cast %109 : vector<8xf32> to vector<8x1xf32>
    %111 = vector.broadcast %110 : vector<8x1xf32> to vector<8x8xf32>
    %112 = arith.divf %108, %111 : vector<8x8xf32>
    %cst_71 = arith.constant dense<0.000000e+00> : vector<8x16xf32>
    %113 = tpu.matmul %112, %87, %cst_71 {dimension_numbers = #tpu.dot_dimension_numbers<[1], [0], [0], [1], [0, 0, 1, 1], [], []>} : vector<8x8xf32>, vector<8x16xf32>, vector<8x16xf32> -> vector<8x16xf32>
    %cst_72 = arith.constant 0.000000e+00 : f32
    %114 = vector.broadcast %cst_72 : f32 to vector<8x16xf32>
    %115 = arith.cmpf ogt, %113, %114 : vector<8x16xf32>
    %cst_73 = arith.constant 0.000000e+00 : f32
    %116 = vector.broadcast %cst_73 : f32 to vector<8x16xf32>
    %117 = arith.minimumf %113, %116 : vector<8x16xf32>
    %118 = math.exp %117 : vector<8x16xf32>
    %cst_74 = arith.constant 1.000000e+00 : f32
    %119 = vector.broadcast %cst_74 : f32 to vector<8x16xf32>
    %120 = arith.subf %118, %119 : vector<8x16xf32>
    %121 = arith.select %115, %113, %120 : vector<8x16xi1>, vector<8x16xf32>
    %cst_75 = arith.constant 5.000000e-01 : f32
    %122 = vector.broadcast %cst_75 : f32 to vector<8x16xf32>
    %123 = arith.mulf %122, %121 : vector<8x16xf32>
    %cst_76 = arith.constant 5.000000e-01 : f32
    %124 = vector.broadcast %cst_76 : f32 to vector<8x16xf32>
    %125 = arith.mulf %124, %14 : vector<8x16xf32>
    %126 = arith.addf %123, %125 : vector<8x16xf32>
    %c0_77 = arith.constant 0 : index
    %c0_78 = arith.constant 0 : index
    %127 = vector.load %arg20[%c0_77, %c0_78] : memref<16x8xf32, #tpu.memory_space<vmem>>, vector<16x8xf32>
    %cst_79 = arith.constant dense<0.000000e+00> : vector<8x8xf32>
    %128 = tpu.matmul %126, %127, %cst_79 {dimension_numbers = #tpu.dot_dimension_numbers<[1], [0], [0], [1], [0, 0, 1, 1], [], []>} : vector<8x16xf32>, vector<16x8xf32>, vector<8x8xf32> -> vector<8x8xf32>
    %c0_80 = arith.constant 0 : index
    %c0_81 = arith.constant 0 : index
    %129 = vector.load %arg21[%c0_80, %c0_81] : memref<8x2xf32, #tpu.memory_space<vmem>>, vector<8x2xf32>
    %cst_82 = arith.constant dense<0.000000e+00> : vector<8x2xf32>
    %130 = tpu.matmul %128, %129, %cst_82 {dimension_numbers = #tpu.dot_dimension_numbers<[1], [0], [0], [1], [0, 0, 1, 1], [], []>} : vector<8x8xf32>, vector<8x2xf32>, vector<8x2xf32> -> vector<8x2xf32>
    %131 = vector.extract_strided_slice %130 {offsets = [0, 0], sizes = [8, 1], strides = [1, 1]} : vector<8x2xf32> to vector<8x1xf32>
    %132 = vector.extract_strided_slice %130 {offsets = [0, 1], sizes = [8, 1], strides = [1, 1]} : vector<8x2xf32> to vector<8x1xf32>
    %133 = tpu.transpose %132, [1, 0] : vector<8x1xf32> -> vector<1x8xf32>
    %134 = vector.broadcast %131 : vector<8x1xf32> to vector<8x8xf32>
    %135 = vector.broadcast %133 : vector<1x8xf32> to vector<8x8xf32>
    %136 = arith.addf %134, %135 : vector<8x8xf32>
    %137 = arith.mulf %136, %43 : vector<8x8xf32>
    %cst_83 = arith.constant 0.000000e+00 : f32
    %138 = vector.broadcast %cst_83 : f32 to vector<8x8xf32>
    %139 = arith.cmpf ogt, %137, %138 : vector<8x8xf32>
    %cst_84 = arith.constant 2.000000e-01 : f32
    %140 = vector.broadcast %cst_84 : f32 to vector<8x8xf32>
    %141 = arith.mulf %140, %137 : vector<8x8xf32>
    %142 = arith.select %139, %137, %141 : vector<8x8xi1>, vector<8x8xf32>
    %cst_85 = arith.constant -9.000000e+15 : f32
    %143 = vector.broadcast %cst_85 : f32 to vector<8x8xf32>
    %144 = arith.select %42, %142, %143 : vector<8x8xi1>, vector<8x8xf32>
    %cst_86 = arith.constant dense<0xFF800000> : vector<8xf32>
    %145 = vector.multi_reduction <maximumf>, %144, %cst_86 [1] : vector<8x8xf32> to vector<8xf32>
    %146 = vector.shape_cast %145 : vector<8xf32> to vector<8x1xf32>
    %147 = vector.broadcast %146 : vector<8x1xf32> to vector<8x8xf32>
    %148 = arith.subf %144, %147 : vector<8x8xf32>
    %149 = math.exp %148 : vector<8x8xf32>
    %cst_87 = arith.constant dense<0.000000e+00> : vector<8xf32>
    %150 = vector.multi_reduction <add>, %149, %cst_87 [1] : vector<8x8xf32> to vector<8xf32>
    %151 = vector.shape_cast %150 : vector<8xf32> to vector<8x1xf32>
    %152 = vector.broadcast %151 : vector<8x1xf32> to vector<8x8xf32>
    %153 = arith.divf %149, %152 : vector<8x8xf32>
    %cst_88 = arith.constant dense<0.000000e+00> : vector<8x8xf32>
    %154 = tpu.matmul %153, %128, %cst_88 {dimension_numbers = #tpu.dot_dimension_numbers<[1], [0], [0], [1], [0, 0, 1, 1], [], []>} : vector<8x8xf32>, vector<8x8xf32>, vector<8x8xf32> -> vector<8x8xf32>
    %cst_89 = arith.constant 0.000000e+00 : f32
    %155 = vector.broadcast %cst_89 : f32 to vector<8x8xf32>
    %156 = arith.cmpf ogt, %154, %155 : vector<8x8xf32>
    %cst_90 = arith.constant 0.000000e+00 : f32
    %157 = vector.broadcast %cst_90 : f32 to vector<8x8xf32>
    %158 = arith.minimumf %154, %157 : vector<8x8xf32>
    %159 = math.exp %158 : vector<8x8xf32>
    %cst_91 = arith.constant 1.000000e+00 : f32
    %160 = vector.broadcast %cst_91 : f32 to vector<8x8xf32>
    %161 = arith.subf %159, %160 : vector<8x8xf32>
    %162 = arith.select %156, %154, %161 : vector<8x8xi1>, vector<8x8xf32>
    %cst_92 = arith.constant 5.000000e-01 : f32
    %163 = vector.broadcast %cst_92 : f32 to vector<8x8xf32>
    %164 = arith.mulf %163, %162 : vector<8x8xf32>
    %cst_93 = arith.constant 5.000000e-01 : f32
    %165 = vector.broadcast %cst_93 : f32 to vector<8x8xf32>
    %166 = arith.mulf %165, %19 : vector<8x8xf32>
    %167 = arith.addf %164, %166 : vector<8x8xf32>
    %c0_94 = arith.constant 0 : index
    %c0_95 = arith.constant 0 : index
    %168 = vector.load %arg28[%c0_94, %c0_95] : memref<8x8xf32, #tpu.memory_space<vmem>>, vector<8x8xf32>
    tpu.vector_store %arg28[%c0_94, %c0_95], %167 {strides = array<i32>} : memref<8x8xf32, #tpu.memory_space<vmem>>, vector<8x8xf32>,
    %c0_96 = arith.constant 0 : index
    %c0_97 = arith.constant 0 : index
    %169 = vector.load %arg22[%c0_96, %c0_97] : memref<8x4xf32, #tpu.memory_space<vmem>>, vector<8x4xf32>
    %cst_98 = arith.constant dense<0.000000e+00> : vector<8x4xf32>
    %170 = tpu.matmul %167, %169, %cst_98 {dimension_numbers = #tpu.dot_dimension_numbers<[1], [0], [0], [1], [0, 0, 1, 1], [], []>} : vector<8x8xf32>, vector<8x4xf32>, vector<8x4xf32> -> vector<8x4xf32>
    %c0_99 = arith.constant 0 : index
    %c0_100 = arith.constant 0 : index
    %171 = vector.load %arg23[%c0_99, %c0_100] : memref<4x2xf32, #tpu.memory_space<vmem>>, vector<4x2xf32>
    %cst_101 = arith.constant dense<0.000000e+00> : vector<8x2xf32>
    %172 = tpu.matmul %170, %171, %cst_101 {dimension_numbers = #tpu.dot_dimension_numbers<[1], [0], [0], [1], [0, 0, 1, 1], [], []>} : vector<8x4xf32>, vector<4x2xf32>, vector<8x2xf32> -> vector<8x2xf32>
    %173 = vector.extract_strided_slice %172 {offsets = [0, 0], sizes = [8, 1], strides = [1, 1]} : vector<8x2xf32> to vector<8x1xf32>
    %174 = vector.extract_strided_slice %172 {offsets = [0, 1], sizes = [8, 1], strides = [1, 1]} : vector<8x2xf32> to vector<8x1xf32>
    %175 = tpu.transpose %174, [1, 0] : vector<8x1xf32> -> vector<1x8xf32>
    %176 = vector.broadcast %173 : vector<8x1xf32> to vector<8x8xf32>
    %177 = vector.broadcast %175 : vector<1x8xf32> to vector<8x8xf32>
    %178 = arith.addf %176, %177 : vector<8x8xf32>
    %179 = arith.mulf %178, %43 : vector<8x8xf32>
    %cst_102 = arith.constant 0.000000e+00 : f32
    %180 = vector.broadcast %cst_102 : f32 to vector<8x8xf32>
    %181 = arith.cmpf ogt, %179, %180 : vector<8x8xf32>
    %cst_103 = arith.constant 2.000000e-01 : f32
    %182 = vector.broadcast %cst_103 : f32 to vector<8x8xf32>
    %183 = arith.mulf %182, %179 : vector<8x8xf32>
    %184 = arith.select %181, %179, %183 : vector<8x8xi1>, vector<8x8xf32>
    %cst_104 = arith.constant -9.000000e+15 : f32
    %185 = vector.broadcast %cst_104 : f32 to vector<8x8xf32>
    %186 = arith.select %42, %184, %185 : vector<8x8xi1>, vector<8x8xf32>
    %cst_105 = arith.constant dense<0xFF800000> : vector<8xf32>
    %187 = vector.multi_reduction <maximumf>, %186, %cst_105 [1] : vector<8x8xf32> to vector<8xf32>
    %188 = vector.shape_cast %187 : vector<8xf32> to vector<8x1xf32>
    %189 = vector.broadcast %188 : vector<8x1xf32> to vector<8x8xf32>
    %190 = arith.subf %186, %189 : vector<8x8xf32>
    %191 = math.exp %190 : vector<8x8xf32>
    %cst_106 = arith.constant dense<0.000000e+00> : vector<8xf32>
    %192 = vector.multi_reduction <add>, %191, %cst_106 [1] : vector<8x8xf32> to vector<8xf32>
    %193 = vector.shape_cast %192 : vector<8xf32> to vector<8x1xf32>
    %194 = vector.broadcast %193 : vector<8x1xf32> to vector<8x8xf32>
    %195 = arith.divf %191, %194 : vector<8x8xf32>
    %cst_107 = arith.constant dense<0.000000e+00> : vector<8x4xf32>
    %196 = tpu.matmul %195, %170, %cst_107 {dimension_numbers = #tpu.dot_dimension_numbers<[1], [0], [0], [1], [0, 0, 1, 1], [], []>} : vector<8x8xf32>, vector<8x4xf32>, vector<8x4xf32> -> vector<8x4xf32>
    %cst_108 = arith.constant 0.000000e+00 : f32
    %197 = vector.broadcast %cst_108 : f32 to vector<8x4xf32>
    %198 = arith.cmpf ogt, %196, %197 : vector<8x4xf32>
    %cst_109 = arith.constant 0.000000e+00 : f32
    %199 = vector.broadcast %cst_109 : f32 to vector<8x4xf32>
    %200 = arith.minimumf %196, %199 : vector<8x4xf32>
    %201 = math.exp %200 : vector<8x4xf32>
    %cst_110 = arith.constant 1.000000e+00 : f32
    %202 = vector.broadcast %cst_110 : f32 to vector<8x4xf32>
    %203 = arith.subf %201, %202 : vector<8x4xf32>
    %204 = arith.select %198, %196, %203 : vector<8x4xi1>, vector<8x4xf32>
    %cst_111 = arith.constant dense<0xFF800000> : vector<8xf32>
    %205 = vector.multi_reduction <maximumf>, %204, %cst_111 [1] : vector<8x4xf32> to vector<8xf32>
    %206 = vector.shape_cast %205 : vector<8xf32> to vector<8x1xf32>
    %207 = vector.broadcast %206 : vector<8x1xf32> to vector<8x4xf32>
    %208 = arith.subf %204, %207 : vector<8x4xf32>
    %209 = math.exp %208 : vector<8x4xf32>
    %cst_112 = arith.constant dense<0.000000e+00> : vector<8xf32>
    %210 = vector.multi_reduction <add>, %209, %cst_112 [1] : vector<8x4xf32> to vector<8xf32>
    %211 = vector.shape_cast %210 : vector<8xf32> to vector<8x1xf32>
    %212 = vector.broadcast %211 : vector<8x1xf32> to vector<8x4xf32>
    %213 = arith.divf %209, %212 : vector<8x4xf32>
    %c0_113 = arith.constant 0 : index
    %c0_114 = arith.constant 0 : index
    %214 = vector.load %arg27[%c0_113, %c0_114] : memref<8x4xf32, #tpu.memory_space<vmem>>, vector<8x4xf32>
    tpu.vector_store %arg27[%c0_113, %c0_114], %213 {strides = array<i32>} : memref<8x4xf32, #tpu.memory_space<vmem>>, vector<8x4xf32>,
    %c0_115 = arith.constant 0 : index
    %c0_116 = arith.constant 0 : index
    %215 = vector.load %arg24[%c0_115, %c0_116] : memref<8x4xf32, #tpu.memory_space<vmem>>, vector<8x4xf32>
    %216 = arith.mulf %19, %19 : vector<8x8xf32>
    %cst_117 = arith.constant dense<0.000000e+00> : vector<8xf32>
    %217 = vector.multi_reduction <add>, %216, %cst_117 [1] : vector<8x8xf32> to vector<8xf32>
    %218 = vector.shape_cast %217 : vector<8xf32> to vector<8x1xf32>
    %219 = arith.mulf %215, %215 : vector<8x4xf32>
    %cst_118 = arith.constant dense<0.000000e+00> : vector<4xf32>
    %220 = vector.multi_reduction <add>, %219, %cst_118 [0] : vector<8x4xf32> to vector<4xf32>
    %221 = vector.shape_cast %220 : vector<4xf32> to vector<1x4xf32>
    %cst_119 = arith.constant dense<0.000000e+00> : vector<8x4xf32>
    %222 = tpu.matmul %19, %215, %cst_119 {dimension_numbers = #tpu.dot_dimension_numbers<[1], [0], [0], [1], [0, 0, 1, 1], [], []>} : vector<8x8xf32>, vector<8x4xf32>, vector<8x4xf32> -> vector<8x4xf32>
    %223 = vector.broadcast %218 : vector<8x1xf32> to vector<8x4xf32>
    %224 = vector.broadcast %221 : vector<1x4xf32> to vector<8x4xf32>
    %225 = arith.addf %223, %224 : vector<8x4xf32>
    %cst_120 = arith.constant 2.000000e+00 : f32
    %226 = vector.broadcast %cst_120 : f32 to vector<8x4xf32>
    %227 = arith.mulf %226, %222 : vector<8x4xf32>
    %228 = arith.subf %225, %227 : vector<8x4xf32>
    %cst_121 = arith.constant 0.000000e+00 : f32
    %229 = vector.broadcast %cst_121 : f32 to vector<8x4xf32>
    %230 = arith.maximumf %228, %229 : vector<8x4xf32>
    %cst_122 = arith.constant 1.000000e+00 : f32
    %231 = vector.broadcast %cst_122 : f32 to vector<8x4xf32>
    %232 = arith.divf %230, %231 : vector<8x4xf32>
    %cst_123 = arith.constant 1.000000e+00 : f32
    %233 = vector.broadcast %cst_123 : f32 to vector<8x4xf32>
    %234 = arith.addf %233, %232 : vector<8x4xf32>
    %cst_124 = arith.constant 1.000000e+00 : f32
    %235 = vector.broadcast %cst_124 : f32 to vector<8x4xf32>
    %236 = arith.divf %235, %234 : vector<8x4xf32>
    %cst_125 = arith.constant dense<0.000000e+00> : vector<8xf32>
    %237 = vector.multi_reduction <add>, %236, %cst_125 [1] : vector<8x4xf32> to vector<8xf32>
    %238 = vector.shape_cast %237 : vector<8xf32> to vector<8x1xf32>
    %239 = vector.broadcast %238 : vector<8x1xf32> to vector<8x4xf32>
    %240 = arith.divf %236, %239 : vector<8x4xf32>
    %c0_126 = arith.constant 0 : index
    %c0_127 = arith.constant 0 : index
    %241 = vector.load %arg26[%c0_126, %c0_127] : memref<8x4xf32, #tpu.memory_space<vmem>>, vector<8x4xf32>
    tpu.vector_store %arg26[%c0_126, %c0_127], %240 {strides = array<i32>} : memref<8x4xf32, #tpu.memory_space<vmem>>, vector<8x4xf32>,
    return
  }
}

</mosaic_0001>

<llo_original>
// kernel: tpu_custom_call.1
$region0: #{tpu_custom_call.1}
  #allocation0 [shape = 'u32[]', space=smem, size = 0x4, offset = 0x4, fixed_abs, tag = 'smem constant byte address 0x4 - core index']
  #allocation1 [shape = 'u32[144,128]{1,0:T(1,128)}', space=vmem, size = 0x12000, scoped, tag = 'internal scratch']
  %s0 = inlined_call_operand.vmem [shape: f32[8,32], index: 0, kind: input, shape index: {}]
  %s1 = inlined_call_operand.vmem [shape: f32[8,16], index: 1, kind: input, shape index: {}]
  %s2 = inlined_call_operand.vmem [shape: f32[8,8], index: 2, kind: input, shape index: {}]
  %s3 = inlined_call_operand.vmem [shape: f32[8,8], index: 3, kind: input, shape index: {}]
  %s4 = inlined_call_operand.vmem [shape: f32[32,16], index: 4, kind: input, shape index: {}]
  %s5 = inlined_call_operand.vmem [shape: f32[1,16], index: 5, kind: input, shape index: {}]
  %s6 = inlined_call_operand.vmem [shape: f32[16,16], index: 6, kind: input, shape index: {}]
  %s7 = inlined_call_operand.vmem [shape: f32[1,16], index: 7, kind: input, shape index: {}]
  %s8 = inlined_call_operand.vmem [shape: f32[16,8], index: 8, kind: input, shape index: {}]
  %s9 = inlined_call_operand.vmem [shape: f32[1,8], index: 9, kind: input, shape index: {}]
  %s10 = inlined_call_operand.vmem [shape: f32[8,16], index: 10, kind: input, shape index: {}]
  %s11 = inlined_call_operand.vmem [shape: f32[1,16], index: 11, kind: input, shape index: {}]
  %s12 = inlined_call_operand.vmem [shape: f32[16,16], index: 12, kind: input, shape index: {}]
  %s13 = inlined_call_operand.vmem [shape: f32[1,16], index: 13, kind: input, shape index: {}]
  %s14 = inlined_call_operand.vmem [shape: f32[16,32], index: 14, kind: input, shape index: {}]
  %s15 = inlined_call_operand.vmem [shape: f32[1,32], index: 15, kind: input, shape index: {}]
  %s16 = inlined_call_operand.vmem [shape: f32[16,16], index: 16, kind: input, shape index: {}]
  %s17 = inlined_call_operand.vmem [shape: f32[16,2], index: 17, kind: input, shape index: {}]
  %s18 = inlined_call_operand.vmem [shape: f32[16,16], index: 18, kind: input, shape index: {}]
  %s19 = inlined_call_operand.vmem [shape: f32[16,2], index: 19, kind: input, shape index: {}]
  %s20 = inlined_call_operand.vmem [shape: f32[16,8], index: 20, kind: input, shape index: {}]
  %s21 = inlined_call_operand.vmem [shape: f32[8,2], index: 21, kind: input, shape index: {}]
  %s22 = inlined_call_operand.vmem [shape: f32[8,4], index: 22, kind: input, shape index: {}]
  %s23 = inlined_call_operand.vmem [shape: f32[4,2], index: 23, kind: input, shape index: {}]
  %s24 = inlined_call_operand.vmem [shape: f32[8,4], index: 24, kind: input, shape index: {}]
  %s25 = inlined_call_operand.hbm [shape: f32[8,32], index: 25, kind: output, shape index: {0}]
  %s26 = inlined_call_operand.vmem [shape: f32[8,4], index: 26, kind: output, shape index: {1}]
  %s27 = inlined_call_operand.vmem [shape: f32[8,4], index: 27, kind: output, shape index: {2}]
  %s28 = inlined_call_operand.hbm [shape: f32[8,8], index: 28, kind: output, shape index: {3}]
  %29 = xla_tuple %s25, %s26, %s27, %s28
  %s30 = sld [smem:[#allocation0]]
  $region134: #{tpu_custom_call.1} parent=0
    _
  %s32 = ssub.s32 1, %s30
  %s33 = scalar_select 0, %s32, %s30
  $region1: #{tpu_custom_call.1} parent=0
    #allocation2 [shape = 'u8[4096]{0}', space=vmem, size = 0x1000, scoped, tag = 'output window, operand 0, single buffered']
    #allocation3 [shape = 's32[1]{0}', space=sflag, size = 0x4, scoped, tag = 'scoped memory for tpu_custom_call.1']
    #allocation4 [shape = 'u8[4096]{0}', space=vmem, size = 0x1000, scoped, tag = 'output window, operand 3, single buffered']
    #allocation5 [shape = 's32[1]{0}', space=sflag, size = 0x4, scoped, tag = 'scoped memory for tpu_custom_call.1']
    %34 = vsyncpa [#allocation3], 0
    %35 = vsyncpa [#allocation5], 0
    // Predicated region
    $region2: #{tpu_custom_call.1} parent=1 // pred_check
      _
    $region3: #{tpu_custom_call.1} parent=1 // pred_check_branch
      %37 = sbr.rel (0) target = $region5
    $region4: #{tpu_custom_call.1} parent=1 // pred_region
      _
    $region5: #{tpu_custom_call.1} parent=1 // pred_fallthru
      _
    // Predicated region
    $region6: #{tpu_custom_call.1} parent=1 // pred_check
      _
    $region7: #{tpu_custom_call.1} parent=1 // pred_check_branch
      %39 = sbr.rel (0) target = $region9
    $region8: #{tpu_custom_call.1} parent=1 // pred_region
      _
    $region9: #{tpu_custom_call.1} parent=1 // pred_fallthru
      _
    // Predicated region
    $region10: #{tpu_custom_call.1} parent=1 // pred_check
      _
    $region11: #{tpu_custom_call.1} parent=1 // pred_check_branch
      %41 = sbr.rel (0) target = $region13
    $region12: #{tpu_custom_call.1} parent=1 // pred_region
      _
    $region13: #{tpu_custom_call.1} parent=1 // pred_fallthru
      _
    // Predicated region
    $region14: #{tpu_custom_call.1} parent=1 // pred_check
      _
    $region15: #{tpu_custom_call.1} parent=1 // pred_check_branch
      %43 = sbr.rel (0) target = $region17
    $region16: #{tpu_custom_call.1} parent=1 // pred_region
      _
    $region17: #{tpu_custom_call.1} parent=1 // pred_fallthru
      _
    // Predicated region
    $region18: #{tpu_custom_call.1} parent=1 // pred_check
      _
    $region19: #{tpu_custom_call.1} parent=1 // pred_check_branch
      %45 = sbr.rel (0) target = $region21
    $region20: #{tpu_custom_call.1} parent=1 // pred_region
      _
    $region21: #{tpu_custom_call.1} parent=1 // pred_fallthru
      _
    // Predicated region
    $region22: #{tpu_custom_call.1} parent=1 // pred_check
      _
    $region23: #{tpu_custom_call.1} parent=1 // pred_check_branch
      %47 = sbr.rel (0) target = $region25
    $region24: #{tpu_custom_call.1} parent=1 // pred_region
      _
    $region25: #{tpu_custom_call.1} parent=1 // pred_fallthru
      _
    // Predicated region
    $region26: #{tpu_custom_call.1} parent=1 // pred_check
      _
    $region27: #{tpu_custom_call.1} parent=1 // pred_check_branch
      %49 = sbr.rel (0) target = $region29
    $region28: #{tpu_custom_call.1} parent=1 // pred_region
      _
    $region29: #{tpu_custom_call.1} parent=1 // pred_fallthru
      _
    // Predicated region
    $region30: #{tpu_custom_call.1} parent=1 // pred_check
      _
    $region31: #{tpu_custom_call.1} parent=1 // pred_check_branch
      %51 = sbr.rel (0) target = $region33
    $region32: #{tpu_custom_call.1} parent=1 // pred_region
      _
    $region33: #{tpu_custom_call.1} parent=1 // pred_fallthru
      _
    // Predicated region
    $region34: #{tpu_custom_call.1} parent=1 // pred_check
      _
    $region35: #{tpu_custom_call.1} parent=1 // pred_check_branch
      %53 = sbr.rel (0) target = $region37
    $region36: #{tpu_custom_call.1} parent=1 // pred_region
      _
    $region37: #{tpu_custom_call.1} parent=1 // pred_fallthru
      _
    // Predicated region
    $region38: #{tpu_custom_call.1} parent=1 // pred_check
      _
    $region39: #{tpu_custom_call.1} parent=1 // pred_check_branch
      %55 = sbr.rel (0) target = $region41
    $region40: #{tpu_custom_call.1} parent=1 // pred_region
      _
    $region41: #{tpu_custom_call.1} parent=1 // pred_fallthru
      _
    // Predicated region
    $region42: #{tpu_custom_call.1} parent=1 // pred_check
      _
    $region43: #{tpu_custom_call.1} parent=1 // pred_check_branch
      %57 = sbr.rel (0) target = $region45
    $region44: #{tpu_custom_call.1} parent=1 // pred_region
      _
    $region45: #{tpu_custom_call.1} parent=1 // pred_fallthru
      _
    // Predicated region
    $region46: #{tpu_custom_call.1} parent=1 // pred_check
      _
    $region47: #{tpu_custom_call.1} parent=1 // pred_check_branch
      %59 = sbr.rel (0) target = $region49
    $region48: #{tpu_custom_call.1} parent=1 // pred_region
      _
    $region49: #{tpu_custom_call.1} parent=1 // pred_fallthru
      _
    // Predicated region
    $region50: #{tpu_custom_call.1} parent=1 // pred_check
      _
    $region51: #{tpu_custom_call.1} parent=1 // pred_check_branch
      %61 = sbr.rel (0) target = $region53
    $region52: #{tpu_custom_call.1} parent=1 // pred_region
      _
    $region53: #{tpu_custom_call.1} parent=1 // pred_fallthru
      _
    // Predicated region
    $region54: #{tpu_custom_call.1} parent=1 // pred_check
      _
    $region55: #{tpu_custom_call.1} parent=1 // pred_check_branch
      %63 = sbr.rel (0) target = $region57
    $region56: #{tpu_custom_call.1} parent=1 // pred_region
      _
    $region57: #{tpu_custom_call.1} parent=1 // pred_fallthru
      _
    // Predicated region
    $region58: #{tpu_custom_call.1} parent=1 // pred_check
      _
    $region59: #{tpu_custom_call.1} parent=1 // pred_check_branch
      %65 = sbr.rel (0) target = $region61
    $region60: #{tpu_custom_call.1} parent=1 // pred_region
      _
    $region61: #{tpu_custom_call.1} parent=1 // pred_fallthru
      _
    // Predicated region
    $region62: #{tpu_custom_call.1} parent=1 // pred_check
      _
    $region63: #{tpu_custom_call.1} parent=1 // pred_check_branch
      %67 = sbr.rel (0) target = $region65
    $region64: #{tpu_custom_call.1} parent=1 // pred_region
      _
    $region65: #{tpu_custom_call.1} parent=1 // pred_fallthru
      _
    // Predicated region
    $region66: #{tpu_custom_call.1} parent=1 // pred_check
      _
    $region67: #{tpu_custom_call.1} parent=1 // pred_check_branch
      %69 = sbr.rel (0) target = $region69
    $region68: #{tpu_custom_call.1} parent=1 // pred_region
      _
    $region69: #{tpu_custom_call.1} parent=1 // pred_fallthru
      _
    // Predicated region
    $region70: #{tpu_custom_call.1} parent=1 // pred_check
      _
    $region71: #{tpu_custom_call.1} parent=1 // pred_check_branch
      %71 = sbr.rel (0) target = $region73
    $region72: #{tpu_custom_call.1} parent=1 // pred_region
      _
    $region73: #{tpu_custom_call.1} parent=1 // pred_fallthru
      _
    // Predicated region
    $region74: #{tpu_custom_call.1} parent=1 // pred_check
      _
    $region75: #{tpu_custom_call.1} parent=1 // pred_check_branch
      %73 = sbr.rel (0) target = $region77
    $region76: #{tpu_custom_call.1} parent=1 // pred_region
      _
    $region77: #{tpu_custom_call.1} parent=1 // pred_fallthru
      _
    // Predicated region
    $region78: #{tpu_custom_call.1} parent=1 // pred_check
      _
    $region79: #{tpu_custom_call.1} parent=1 // pred_check_branch
      %75 = sbr.rel (0) target = $region81
    $region80: #{tpu_custom_call.1} parent=1 // pred_region
      _
    $region81: #{tpu_custom_call.1} parent=1 // pred_fallthru
      _
    // Predicated region
    $region82: #{tpu_custom_call.1} parent=1 // pred_check
      _
    $region83: #{tpu_custom_call.1} parent=1 // pred_check_branch
      %77 = sbr.rel (0) target = $region85
    $region84: #{tpu_custom_call.1} parent=1 // pred_region
      _
    $region85: #{tpu_custom_call.1} parent=1 // pred_fallthru
      _
    // Predicated region
    $region86: #{tpu_custom_call.1} parent=1 // pred_check
      _
    $region87: #{tpu_custom_call.1} parent=1 // pred_check_branch
      %79 = sbr.rel (0) target = $region89
    $region88: #{tpu_custom_call.1} parent=1 // pred_region
      _
    $region89: #{tpu_custom_call.1} parent=1 // pred_fallthru
      _
    // Predicated region
    $region90: #{tpu_custom_call.1} parent=1 // pred_check
      _
    $region91: #{tpu_custom_call.1} parent=1 // pred_check_branch
      %81 = sbr.rel (0) target = $region93
    $region92: #{tpu_custom_call.1} parent=1 // pred_region
      _
    $region93: #{tpu_custom_call.1} parent=1 // pred_fallthru
      _
    // Predicated region
    $region94: #{tpu_custom_call.1} parent=1 // pred_check
      _
    $region95: #{tpu_custom_call.1} parent=1 // pred_check_branch
      %83 = sbr.rel (0) target = $region97
    $region96: #{tpu_custom_call.1} parent=1 // pred_region
      _
    $region97: #{tpu_custom_call.1} parent=1 // pred_fallthru
      _
    // Predicated region
    $region98: #{tpu_custom_call.1} parent=1 // pred_check
      _
    $region99: #{tpu_custom_call.1} parent=1 // pred_check_branch
      %85 = sbr.rel (0) target = $region101
    $region100: #{tpu_custom_call.1} parent=1 // pred_region
      _
    $region101: #{tpu_custom_call.1} parent=1 // pred_fallthru
      _
    %v86 = vld [vmem:[%s0] sm:$0xff]
    %v87 = vld [vmem:[%s4] sm:$0xff]
    %v88 = vld [vmem:[%s4 + $0x8] sm:$0xff]
    %v89 = vld [vmem:[%s4 + $0x10] sm:$0xff]
    %v90 = vld [vmem:[%s4 + $0x18] sm:$0xff]
    %v91 = vld [vmem:[%s5] sm:$0x1]
    %v93 = vlaneseq
    %v94 = vshrl.u32 %v93, 7
    %v95 = vsub.s32 0, %v94
    %v96 = vrot.slane %v91, %v95
    %vm98 = vcmask 261120
    %v100 = vsel %vm98, %v86, 0
    %102 = vmatprep.subr.mxu0 0.0
    %103 = vmatpush1.msra.mxu0 %v87
    %104 = vmatprep.subr.mxu0 0.0
    %105 = vmatpush1.msra.mxu0 %v88
    %106 = vmatprep.subr.mxu0 0.0
    %107 = vmatpush1.msra.mxu0 %v89
    %108 = vmatprep.subr.mxu0 0.0
    %109 = vmatpush1.msra.mxu0 %v90
    %110 = vmatprep.subr.mxu0 0.0
    %111 = vmatpush1.msra.mxu0 0.0
    %112 = vmatprep.subr.mxu0 0.0
    %113 = vmatpush1.msra.mxu0 0.0
    %114 = vmatprep.subr.mxu0 0.0
    %115 = vmatpush1.msra.mxu0 0.0
    %116 = vmatprep.subr.mxu0 0.0
    %117 = vmatpush1.msra.mxu0 0.0
    %118 = vmatprep.subr.mxu0 0.0
    %119 = vmatpush1.msra.mxu0 0.0
    %120 = vmatprep.subr.mxu0 0.0
    %121 = vmatpush1.msra.mxu0 0.0
    %122 = vmatprep.subr.mxu0 0.0
    %123 = vmatpush1.msra.mxu0 0.0
    %124 = vmatprep.subr.mxu0 0.0
    %125 = vmatpush1.msra.mxu0 0.0
    %126 = vmatprep.subr.mxu0 0.0
    %127 = vmatpush1.msra.mxu0 0.0
    %128 = vmatprep.subr.mxu0 0.0
    %129 = vmatpush1.msra.mxu0 0.0
    %130 = vmatprep.subr.mxu0 0.0
    %131 = vmatpush1.msra.mxu0 0.0
    %132 = vmatprep.subr.mxu0 0.0
    %133 = vmatpush1.msra.mxu0 0.0
    %134 = vmatprep.subr.mxu0 0.0
    %135 = vmatpush1.msra.mxu0 0.0
    %136 = vmatprep.subr.mxu0 0.0
    %137 = vmatpush1.msra.mxu0 0.0
    %138 = vmatprep.subr.mxu0 0.0
    %139 = vmatpush1.msra.mxu0 0.0
    %140 = vmatprep.subr.mxu0 0.0
    %141 = vmatpush1.msra.mxu0 0.0
    %142 = vmatprep.subr.mxu0 0.0
    %143 = vmatpush1.msra.mxu0 0.0
    %144 = vmatprep.subr.mxu0 0.0
    %145 = vmatpush1.msra.mxu0 0.0
    %146 = vmatprep.subr.mxu0 0.0
    %147 = vmatpush1.msra.mxu0 0.0
    %148 = vmatprep.subr.mxu0 0.0
    %149 = vmatpush1.msra.mxu0 0.0
    %150 = vmatprep.subr.mxu0 0.0
    %151 = vmatpush1.msra.mxu0 0.0
    %152 = vmatprep.subr.mxu0 0.0
    %153 = vmatpush1.msra.mxu0 0.0
    %154 = vmatprep.subr.mxu0 0.0
    %155 = vmatpush1.msra.mxu0 0.0
    %156 = vmatprep.subr.mxu0 0.0
    %157 = vmatpush1.msra.mxu0 0.0
    %158 = vmatprep.subr.mxu0 0.0
    %159 = vmatpush1.msra.mxu0 0.0
    %160 = vmatprep.subr.mxu0 0.0
    %161 = vmatpush1.msra.mxu0 0.0
    %162 = vmatprep.subr.mxu0 0.0
    %163 = vmatpush1.msra.mxu0 0.0
    %164 = vmatprep.subr.mxu0 0.0
    %165 = vmatpush1.msra.mxu0 0.0
    %166 = vmatprep.mubr.f32.mxu0 0.0
    %167 = vmatmul.mubr.f32.gmra.mrb[0].mxu0 %v100
    %v168 = vpop.f32.mrb[0].mxu0
    %v169 = vadd.f32 %v96, %v168
    %v170 = vpop.f32.mrb[0].mxu0
    %171 = vdwg.mxu0
    %v172 = vmax.f32 %v169, 0.0
    %v173 = vld [vmem:[%s6] sm:$0xff]
    %v174 = vld [vmem:[%s6 + $0x8] sm:$0xff]
    %v175 = vld [vmem:[%s7] sm:$0x1]
    %v177 = vlaneseq
    %v178 = vshrl.u32 %v177, 7
    %v179 = vsub.s32 0, %v178
    %v180 = vrot.slane %v175, %v179
    %vm182 = vcmask 130048
    %v184 = vsel %vm182, %v172, 0
    %186 = vmatprep.subr.mxu0 0.0
    %187 = vmatpush1.msra.mxu0 %v173
    %188 = vmatprep.subr.mxu0 0.0
    %189 = vmatpush1.msra.mxu0 %v174
    %190 = vmatprep.subr.mxu0 0.0
    %191 = vmatpush1.msra.mxu0 0.0
    %192 = vmatprep.subr.mxu0 0.0
    %193 = vmatpush1.msra.mxu0 0.0
    %194 = vmatprep.subr.mxu0 0.0
    %195 = vmatpush1.msra.mxu0 0.0
    %196 = vmatprep.subr.mxu0 0.0
    %197 = vmatpush1.msra.mxu0 0.0
    %198 = vmatprep.subr.mxu0 0.0
    %199 = vmatpush1.msra.mxu0 0.0
    %200 = vmatprep.subr.mxu0 0.0
    %201 = vmatpush1.msra.mxu0 0.0
    %202 = vmatprep.subr.mxu0 0.0
    %203 = vmatpush1.msra.mxu0 0.0
    %204 = vmatprep.subr.mxu0 0.0
    %205 = vmatpush1.msra.mxu0 0.0
    %206 = vmatprep.subr.mxu0 0.0
    %207 = vmatpush1.msra.mxu0 0.0
    %208 = vmatprep.subr.mxu0 0.0
    %209 = vmatpush1.msra.mxu0 0.0
    %210 = vmatprep.subr.mxu0 0.0
    %211 = vmatpush1.msra.mxu0 0.0
    %212 = vmatprep.subr.mxu0 0.0
    %213 = vmatpush1.msra.mxu0 0.0
    %214 = vmatprep.subr.mxu0 0.0
    %215 = vmatpush1.msra.mxu0 0.0
    %216 = vmatprep.subr.mxu0 0.0
    %217 = vmatpush1.msra.mxu0 0.0
    %218 = vmatprep.subr.mxu0 0.0
    %219 = vmatpush1.msra.mxu0 0.0
    %220 = vmatprep.subr.mxu0 0.0
    %221 = vmatpush1.msra.mxu0 0.0
    %222 = vmatprep.subr.mxu0 0.0
    %223 = vmatpush1.msra.mxu0 0.0
    %224 = vmatprep.subr.mxu0 0.0
    %225 = vmatpush1.msra.mxu0 0.0
    %226 = vmatprep.subr.mxu0 0.0
    %227 = vmatpush1.msra.mxu0 0.0
    %228 = vmatprep.subr.mxu0 0.0
    %229 = vmatpush1.msra.mxu0 0.0
    %230 = vmatprep.subr.mxu0 0.0
    %231 = vmatpush1.msra.mxu0 0.0
    %232 = vmatprep.subr.mxu0 0.0
    %233 = vmatpush1.msra.mxu0 0.0
    %234 = vmatprep.subr.mxu0 0.0
    %235 = vmatpush1.msra.mxu0 0.0
    %236 = vmatprep.subr.mxu0 0.0
    %237 = vmatpush1.msra.mxu0 0.0
    %238 = vmatprep.subr.mxu0 0.0
    %239 = vmatpush1.msra.mxu0 0.0
    %240 = vmatprep.subr.mxu0 0.0
    %241 = vmatpush1.msra.mxu0 0.0
    %242 = vmatprep.subr.mxu0 0.0
    %243 = vmatpush1.msra.mxu0 0.0
    %244 = vmatprep.subr.mxu0 0.0
    %245 = vmatpush1.msra.mxu0 0.0
    %246 = vmatprep.subr.mxu0 0.0
    %247 = vmatpush1.msra.mxu0 0.0
    %248 = vmatprep.subr.mxu0 0.0
    %249 = vmatpush1.msra.mxu0 0.0
    %250 = vmatprep.mubr.f32.mxu0 0.0
    %251 = vmatmul.mubr.f32.gmra.mrb[0].mxu0 %v184
    %v252 = vpop.f32.mrb[0].mxu0
    %v253 = vadd.f32 %v180, %v252
    %v254 = vpop.f32.mrb[0].mxu0
    %255 = vdwg.mxu0
    %v256 = vmax.f32 %v253, 0.0
    %v257 = vld [vmem:[%s8] sm:$0xff]
    %v258 = vld [vmem:[%s8 + $0x8] sm:$0xff]
    %v259 = vld [vmem:[%s9] sm:$0x1]
    %v261 = vlaneseq
    %v262 = vshrl.u32 %v261, 7
    %v263 = vsub.s32 0, %v262
    %v264 = vrot.slane %v259, %v263
    %v267 = vsel %vm182, %v256, 0
    %269 = vmatprep.subr.mxu0 0.0
    %270 = vmatpush1.msra.mxu0 %v257
    %271 = vmatprep.subr.mxu0 0.0
    %272 = vmatpush1.msra.mxu0 %v258
    %273 = vmatprep.subr.mxu0 0.0
    %274 = vmatpush1.msra.mxu0 0.0
    %275 = vmatprep.subr.mxu0 0.0
    %276 = vmatpush1.msra.mxu0 0.0
    %277 = vmatprep.subr.mxu0 0.0
    %278 = vmatpush1.msra.mxu0 0.0
    %279 = vmatprep.subr.mxu0 0.0
    %280 = vmatpush1.msra.mxu0 0.0
    %281 = vmatprep.subr.mxu0 0.0
    %282 = vmatpush1.msra.mxu0 0.0
    %283 = vmatprep.subr.mxu0 0.0
    %284 = vmatpush1.msra.mxu0 0.0
    %285 = vmatprep.subr.mxu0 0.0
    %286 = vmatpush1.msra.mxu0 0.0
    %287 = vmatprep.subr.mxu0 0.0
    %288 = vmatpush1.msra.mxu0 0.0
    %289 = vmatprep.subr.mxu0 0.0
    %290 = vmatpush1.msra.mxu0 0.0
    %291 = vmatprep.subr.mxu0 0.0
    %292 = vmatpush1.msra.mxu0 0.0
    %293 = vmatprep.subr.mxu0 0.0
    %294 = vmatpush1.msra.mxu0 0.0
    %295 = vmatprep.subr.mxu0 0.0
    %296 = vmatpush1.msra.mxu0 0.0
    %297 = vmatprep.subr.mxu0 0.0
    %298 = vmatpush1.msra.mxu0 0.0
    %299 = vmatprep.subr.mxu0 0.0
    %300 = vmatpush1.msra.mxu0 0.0
    %301 = vmatprep.subr.mxu0 0.0
    %302 = vmatpush1.msra.mxu0 0.0
    %303 = vmatprep.subr.mxu0 0.0
    %304 = vmatpush1.msra.mxu0 0.0
    %305 = vmatprep.subr.mxu0 0.0
    %306 = vmatpush1.msra.mxu0 0.0
    %307 = vmatprep.subr.mxu0 0.0
    %308 = vmatpush1.msra.mxu0 0.0
    %309 = vmatprep.subr.mxu0 0.0
    %310 = vmatpush1.msra.mxu0 0.0
    %311 = vmatprep.subr.mxu0 0.0
    %312 = vmatpush1.msra.mxu0 0.0
    %313 = vmatprep.subr.mxu0 0.0
    %314 = vmatpush1.msra.mxu0 0.0
    %315 = vmatprep.subr.mxu0 0.0
    %316 = vmatpush1.msra.mxu0 0.0
    %317 = vmatprep.subr.mxu0 0.0
    %318 = vmatpush1.msra.mxu0 0.0
    %319 = vmatprep.subr.mxu0 0.0
    %320 = vmatpush1.msra.mxu0 0.0
    %321 = vmatprep.subr.mxu0 0.0
    %322 = vmatpush1.msra.mxu0 0.0
    %323 = vmatprep.subr.mxu0 0.0
    %324 = vmatpush1.msra.mxu0 0.0
    %325 = vmatprep.subr.mxu0 0.0
    %326 = vmatpush1.msra.mxu0 0.0
    %327 = vmatprep.subr.mxu0 0.0
    %328 = vmatpush1.msra.mxu0 0.0
    %329 = vmatprep.subr.mxu0 0.0
    %330 = vmatpush1.msra.mxu0 0.0
    %331 = vmatprep.subr.mxu0 0.0
    %332 = vmatpush1.msra.mxu0 0.0
    %333 = vmatprep.mubr.f32.mxu0 0.0
    %334 = vmatmul.mubr.f32.gmra.mrb[0].mxu0 %v267
    %v335 = vpop.f32.mrb[0].mxu0
    %v336 = vadd.f32 %v264, %v335
    %v337 = vpop.f32.mrb[0].mxu0
    %338 = vdwg.mxu0
    %v339 = vld [vmem:[%s10] sm:$0xff]
    %v340 = vld [vmem:[%s11] sm:$0x1]
    %v342 = vlaneseq
    %v343 = vshrl.u32 %v342, 7
    %v344 = vsub.s32 0, %v343
    %v345 = vrot.slane %v340, %v344
    %vm347 = vcmask 64512
    %v349 = vsel %vm347, %v336, 0
    %351 = vmatprep.subr.mxu0 0.0
    %352 = vmatpush1.msra.mxu0 %v339
    %353 = vmatprep.subr.mxu0 0.0
    %354 = vmatpush1.msra.mxu0 0.0
    %355 = vmatprep.subr.mxu0 0.0
    %356 = vmatpush1.msra.mxu0 0.0
    %357 = vmatprep.subr.mxu0 0.0
    %358 = vmatpush1.msra.mxu0 0.0
    %359 = vmatprep.subr.mxu0 0.0
    %360 = vmatpush1.msra.mxu0 0.0
    %361 = vmatprep.subr.mxu0 0.0
    %362 = vmatpush1.msra.mxu0 0.0
    %363 = vmatprep.subr.mxu0 0.0
    %364 = vmatpush1.msra.mxu0 0.0
    %365 = vmatprep.subr.mxu0 0.0
    %366 = vmatpush1.msra.mxu0 0.0
    %367 = vmatprep.subr.mxu0 0.0
    %368 = vmatpush1.msra.mxu0 0.0
    %369 = vmatprep.subr.mxu0 0.0
    %370 = vmatpush1.msra.mxu0 0.0
    %371 = vmatprep.subr.mxu0 0.0
    %372 = vmatpush1.msra.mxu0 0.0
    %373 = vmatprep.subr.mxu0 0.0
    %374 = vmatpush1.msra.mxu0 0.0
    %375 = vmatprep.subr.mxu0 0.0
    %376 = vmatpush1.msra.mxu0 0.0
    %377 = vmatprep.subr.mxu0 0.0
    %378 = vmatpush1.msra.mxu0 0.0
    %379 = vmatprep.subr.mxu0 0.0
    %380 = vmatpush1.msra.mxu0 0.0
    %381 = vmatprep.subr.mxu0 0.0
    %382 = vmatpush1.msra.mxu0 0.0
    %383 = vmatprep.subr.mxu0 0.0
    %384 = vmatpush1.msra.mxu0 0.0
    %385 = vmatprep.subr.mxu0 0.0
    %386 = vmatpush1.msra.mxu0 0.0
    %387 = vmatprep.subr.mxu0 0.0
    %388 = vmatpush1.msra.mxu0 0.0
    %389 = vmatprep.subr.mxu0 0.0
    %390 = vmatpush1.msra.mxu0 0.0
    %391 = vmatprep.subr.mxu0 0.0
    %392 = vmatpush1.msra.mxu0 0.0
    %393 = vmatprep.subr.mxu0 0.0
    %394 = vmatpush1.msra.mxu0 0.0
    %395 = vmatprep.subr.mxu0 0.0
    %396 = vmatpush1.msra.mxu0 0.0
    %397 = vmatprep.subr.mxu0 0.0
    %398 = vmatpush1.msra.mxu0 0.0
    %399 = vmatprep.subr.mxu0 0.0
    %400 = vmatpush1.msra.mxu0 0.0
    %401 = vmatprep.subr.mxu0 0.0
    %402 = vmatpush1.msra.mxu0 0.0
    %403 = vmatprep.subr.mxu0 0.0
    %404 = vmatpush1.msra.mxu0 0.0
    %405 = vmatprep.subr.mxu0 0.0
    %406 = vmatpush1.msra.mxu0 0.0
    %407 = vmatprep.subr.mxu0 0.0
    %408 = vmatpush1.msra.mxu0 0.0
    %409 = vmatprep.subr.mxu0 0.0
    %410 = vmatpush1.msra.mxu0 0.0
    %411 = vmatprep.subr.mxu0 0.0
    %412 = vmatpush1.msra.mxu0 0.0
    %413 = vmatprep.subr.mxu0 0.0
    %414 = vmatpush1.msra.mxu0 0.0
    %415 = vmatprep.mubr.f32.mxu0 0.0
    %416 = vmatmul.mubr.f32.gmra.mrb[0].mxu0 %v349
    %v417 = vpop.f32.mrb[0].mxu0
    %v418 = vadd.f32 %v345, %v417
    %v419 = vpop.f32.mrb[0].mxu0
    %420 = vdwg.mxu0
    %v421 = vmax.f32 %v418, 0.0
    %v422 = vld [vmem:[%s12] sm:$0xff]
    %v423 = vld [vmem:[%s12 + $0x8] sm:$0xff]
    %v424 = vld [vmem:[%s13] sm:$0x1]
    %v426 = vlaneseq
    %v427 = vshrl.u32 %v426, 7
    %v428 = vsub.s32 0, %v427
    %v429 = vrot.slane %v424, %v428
    %v432 = vsel %vm182, %v421, 0
    %434 = vmatprep.subr.mxu0 0.0
    %435 = vmatpush1.msra.mxu0 %v422
    %436 = vmatprep.subr.mxu0 0.0
    %437 = vmatpush1.msra.mxu0 %v423
    %438 = vmatprep.subr.mxu0 0.0
    %439 = vmatpush1.msra.mxu0 0.0
    %440 = vmatprep.subr.mxu0 0.0
    %441 = vmatpush1.msra.mxu0 0.0
    %442 = vmatprep.subr.mxu0 0.0
    %443 = vmatpush1.msra.mxu0 0.0
    %444 = vmatprep.subr.mxu0 0.0
    %445 = vmatpush1.msra.mxu0 0.0
    %446 = vmatprep.subr.mxu0 0.0
    %447 = vmatpush1.msra.mxu0 0.0
    %448 = vmatprep.subr.mxu0 0.0
    %449 = vmatpush1.msra.mxu0 0.0
    %450 = vmatprep.subr.mxu0 0.0
    %451 = vmatpush1.msra.mxu0 0.0
    %452 = vmatprep.subr.mxu0 0.0
    %453 = vmatpush1.msra.mxu0 0.0
    %454 = vmatprep.subr.mxu0 0.0
    %455 = vmatpush1.msra.mxu0 0.0
    %456 = vmatprep.subr.mxu0 0.0
    %457 = vmatpush1.msra.mxu0 0.0
    %458 = vmatprep.subr.mxu0 0.0
    %459 = vmatpush1.msra.mxu0 0.0
    %460 = vmatprep.subr.mxu0 0.0
    %461 = vmatpush1.msra.mxu0 0.0
    %462 = vmatprep.subr.mxu0 0.0
    %463 = vmatpush1.msra.mxu0 0.0
    %464 = vmatprep.subr.mxu0 0.0
    %465 = vmatpush1.msra.mxu0 0.0
    %466 = vmatprep.subr.mxu0 0.0
    %467 = vmatpush1.msra.mxu0 0.0
    %468 = vmatprep.subr.mxu0 0.0
    %469 = vmatpush1.msra.mxu0 0.0
    %470 = vmatprep.subr.mxu0 0.0
    %471 = vmatpush1.msra.mxu0 0.0
    %472 = vmatprep.subr.mxu0 0.0
    %473 = vmatpush1.msra.mxu0 0.0
    %474 = vmatprep.subr.mxu0 0.0
    %475 = vmatpush1.msra.mxu0 0.0
    %476 = vmatprep.subr.mxu0 0.0
    %477 = vmatpush1.msra.mxu0 0.0
    %478 = vmatprep.subr.mxu0 0.0
    %479 = vmatpush1.msra.mxu0 0.0
    %480 = vmatprep.subr.mxu0 0.0
    %481 = vmatpush1.msra.mxu0 0.0
    %482 = vmatprep.subr.mxu0 0.0
    %483 = vmatpush1.msra.mxu0 0.0
    %484 = vmatprep.subr.mxu0 0.0
    %485 = vmatpush1.msra.mxu0 0.0
    %486 = vmatprep.subr.mxu0 0.0
    %487 = vmatpush1.msra.mxu0 0.0
    %488 = vmatprep.subr.mxu0 0.0
    %489 = vmatpush1.msra.mxu0 0.0
    %490 = vmatprep.subr.mxu0 0.0
    %491 = vmatpush1.msra.mxu0 0.0
    %492 = vmatprep.subr.mxu0 0.0
    %493 = vmatpush1.msra.mxu0 0.0
    %494 = vmatprep.subr.mxu0 0.0
    %495 = vmatpush1.msra.mxu0 0.0
    %496 = vmatprep.subr.mxu0 0.0
    %497 = vmatpush1.msra.mxu0 0.0
    %498 = vmatprep.mubr.f32.mxu0 0.0
    %499 = vmatmul.mubr.f32.gmra.mrb[0].mxu0 %v432
    %v500 = vpop.f32.mrb[0].mxu0
    %v501 = vadd.f32 %v429, %v500
    %v502 = vpop.f32.mrb[0].mxu0
    %503 = vdwg.mxu0
    %v504 = vmax.f32 %v501, 0.0
    %v505 = vld [vmem:[%s14] sm:$0xff]
    %v506 = vld [vmem:[%s14 + $0x8] sm:$0xff]
    %v507 = vld [vmem:[%s15] sm:$0x1]
    %v509 = vlaneseq
    %v510 = vshrl.u32 %v509, 7
    %v511 = vsub.s32 0, %v510
    %v512 = vrot.slane %v507, %v511
    %v515 = vsel %vm182, %v504, 0
    %517 = vmatprep.subr.mxu0 0.0
    %518 = vmatpush1.msra.mxu0 %v505
    %519 = vmatprep.subr.mxu0 0.0
    %520 = vmatpush1.msra.mxu0 %v506
    %521 = vmatprep.subr.mxu0 0.0
    %522 = vmatpush1.msra.mxu0 0.0
    %523 = vmatprep.subr.mxu0 0.0
    %524 = vmatpush1.msra.mxu0 0.0
    %525 = vmatprep.subr.mxu0 0.0
    %526 = vmatpush1.msra.mxu0 0.0
    %527 = vmatprep.subr.mxu0 0.0
    %528 = vmatpush1.msra.mxu0 0.0
    %529 = vmatprep.subr.mxu0 0.0
    %530 = vmatpush1.msra.mxu0 0.0
    %531 = vmatprep.subr.mxu0 0.0
    %532 = vmatpush1.msra.mxu0 0.0
    %533 = vmatprep.subr.mxu0 0.0
    %534 = vmatpush1.msra.mxu0 0.0
    %535 = vmatprep.subr.mxu0 0.0
    %536 = vmatpush1.msra.mxu0 0.0
    %537 = vmatprep.subr.mxu0 0.0
    %538 = vmatpush1.msra.mxu0 0.0
    %539 = vmatprep.subr.mxu0 0.0
    %540 = vmatpush1.msra.mxu0 0.0
    %541 = vmatprep.subr.mxu0 0.0
    %542 = vmatpush1.msra.mxu0 0.0
    %543 = vmatprep.subr.mxu0 0.0
    %544 = vmatpush1.msra.mxu0 0.0
    %545 = vmatprep.subr.mxu0 0.0
    %546 = vmatpush1.msra.mxu0 0.0
    %547 = vmatprep.subr.mxu0 0.0
    %548 = vmatpush1.msra.mxu0 0.0
    %549 = vmatprep.subr.mxu0 0.0
    %550 = vmatpush1.msra.mxu0 0.0
    %551 = vmatprep.subr.mxu0 0.0
    %552 = vmatpush1.msra.mxu0 0.0
    %553 = vmatprep.subr.mxu0 0.0
    %554 = vmatpush1.msra.mxu0 0.0
    %555 = vmatprep.subr.mxu0 0.0
    %556 = vmatpush1.msra.mxu0 0.0
    %557 = vmatprep.subr.mxu0 0.0
    %558 = vmatpush1.msra.mxu0 0.0
    %559 = vmatprep.subr.mxu0 0.0
    %560 = vmatpush1.msra.mxu0 0.0
    %561 = vmatprep.subr.mxu0 0.0
    %562 = vmatpush1.msra.mxu0 0.0
    %563 = vmatprep.subr.mxu0 0.0
    %564 = vmatpush1.msra.mxu0 0.0
    %565 = vmatprep.subr.mxu0 0.0
    %566 = vmatpush1.msra.mxu0 0.0
    %567 = vmatprep.subr.mxu0 0.0
    %568 = vmatpush1.msra.mxu0 0.0
    %569 = vmatprep.subr.mxu0 0.0
    %570 = vmatpush1.msra.mxu0 0.0
    %571 = vmatprep.subr.mxu0 0.0
    %572 = vmatpush1.msra.mxu0 0.0
    %573 = vmatprep.subr.mxu0 0.0
    %574 = vmatpush1.msra.mxu0 0.0
    %575 = vmatprep.subr.mxu0 0.0
    %576 = vmatpush1.msra.mxu0 0.0
    %577 = vmatprep.subr.mxu0 0.0
    %578 = vmatpush1.msra.mxu0 0.0
    %579 = vmatprep.subr.mxu0 0.0
    %580 = vmatpush1.msra.mxu0 0.0
    %581 = vmatprep.mubr.f32.mxu0 0.0
    %582 = vmatmul.mubr.f32.gmra.mrb[0].mxu0 %v515
    %v583 = vpop.f32.mrb[0].mxu0
    %v584 = vadd.f32 %v512, %v583
    %v585 = vpop.f32.mrb[0].mxu0
    %586 = vdwg.mxu0
    %587 = vst.msk [vmem:[#allocation2] sm:$0xff] %vm98, %v584
    %v588 = vld [vmem:[%s2] sm:$0xff]
    %vm589 = vcmp.gt.f32.partialorder %v588, 0.0
    %v590 = vld [vmem:[%s3] sm:$0xff]
    %v591 = vld [vmem:[%s1] sm:$0xff]
    %v592 = vld [vmem:[%s16] sm:$0xff]
    %v593 = vld [vmem:[%s16 + $0x8] sm:$0xff]
    %v595 = vsel %vm182, %v591, 0
    %597 = vmatprep.subr.mxu0 0.0
    %598 = vmatpush1.msra.mxu0 %v592
    %599 = vmatprep.subr.mxu0 0.0
    %600 = vmatpush1.msra.mxu0 %v593
    %601 = vmatprep.subr.mxu0 0.0
    %602 = vmatpush1.msra.mxu0 0.0
    %603 = vmatprep.subr.mxu0 0.0
    %604 = vmatpush1.msra.mxu0 0.0
    %605 = vmatprep.subr.mxu0 0.0
    %606 = vmatpush1.msra.mxu0 0.0
    %607 = vmatprep.subr.mxu0 0.0
    %608 = vmatpush1.msra.mxu0 0.0
    %609 = vmatprep.subr.mxu0 0.0
    %610 = vmatpush1.msra.mxu0 0.0
    %611 = vmatprep.subr.mxu0 0.0
    %612 = vmatpush1.msra.mxu0 0.0
    %613 = vmatprep.subr.mxu0 0.0
    %614 = vmatpush1.msra.mxu0 0.0
    %615 = vmatprep.subr.mxu0 0.0
    %616 = vmatpush1.msra.mxu0 0.0
    %617 = vmatprep.subr.mxu0 0.0
    %618 = vmatpush1.msra.mxu0 0.0
    %619 = vmatprep.subr.mxu0 0.0
    %620 = vmatpush1.msra.mxu0 0.0
    %621 = vmatprep.subr.mxu0 0.0
    %622 = vmatpush1.msra.mxu0 0.0
    %623 = vmatprep.subr.mxu0 0.0
    %624 = vmatpush1.msra.mxu0 0.0
    %625 = vmatprep.subr.mxu0 0.0
    %626 = vmatpush1.msra.mxu0 0.0
    %627 = vmatprep.subr.mxu0 0.0
    %628 = vmatpush1.msra.mxu0 0.0
    %629 = vmatprep.subr.mxu0 0.0
    %630 = vmatpush1.msra.mxu0 0.0
    %631 = vmatprep.subr.mxu0 0.0
    %632 = vmatpush1.msra.mxu0 0.0
    %633 = vmatprep.subr.mxu0 0.0
    %634 = vmatpush1.msra.mxu0 0.0
    %635 = vmatprep.subr.mxu0 0.0
    %636 = vmatpush1.msra.mxu0 0.0
    %637 = vmatprep.subr.mxu0 0.0
    %638 = vmatpush1.msra.mxu0 0.0
    %639 = vmatprep.subr.mxu0 0.0
    %640 = vmatpush1.msra.mxu0 0.0
    %641 = vmatprep.subr.mxu0 0.0
    %642 = vmatpush1.msra.mxu0 0.0
    %643 = vmatprep.subr.mxu0 0.0
    %644 = vmatpush1.msra.mxu0 0.0
    %645 = vmatprep.subr.mxu0 0.0
    %646 = vmatpush1.msra.mxu0 0.0
    %647 = vmatprep.subr.mxu0 0.0
    %648 = vmatpush1.msra.mxu0 0.0
    %649 = vmatprep.subr.mxu0 0.0
    %650 = vmatpush1.msra.mxu0 0.0
    %651 = vmatprep.subr.mxu0 0.0
    %652 = vmatpush1.msra.mxu0 0.0
    %653 = vmatprep.subr.mxu0 0.0
    %654 = vmatpush1.msra.mxu0 0.0
    %655 = vmatprep.subr.mxu0 0.0
    %656 = vmatpush1.msra.mxu0 0.0
    %657 = vmatprep.subr.mxu0 0.0
    %658 = vmatpush1.msra.mxu0 0.0
    %659 = vmatprep.subr.mxu0 0.0
    %660 = vmatpush1.msra.mxu0 0.0
    %661 = vmatprep.mubr.f32.mxu0 0.0
    %662 = vmatmul.mubr.f32.gmra.mrb[0].mxu0 %v595
    %v663 = vpop.f32.mrb[0].mxu0
    %v664 = vadd.f32 0.0, %v663
    %v665 = vpop.f32.mrb[0].mxu0
    %666 = vdwg.mxu0
    %v667 = vld [vmem:[%s17] sm:$0xff]
    %v668 = vld [vmem:[%s17 + $0x8] sm:$0xff]
    %v670 = vsel %vm182, %v664, 0
    %672 = vmatprep.subr.mxu0 0.0
    %673 = vmatpush1.msra.mxu0 %v667
    %674 = vmatprep.subr.mxu0 0.0
    %675 = vmatpush1.msra.mxu0 %v668
    %676 = vmatprep.subr.mxu0 0.0
    %677 = vmatpush1.msra.mxu0 0.0
    %678 = vmatprep.subr.mxu0 0.0
    %679 = vmatpush1.msra.mxu0 0.0
    %680 = vmatprep.subr.mxu0 0.0
    %681 = vmatpush1.msra.mxu0 0.0
    %682 = vmatprep.subr.mxu0 0.0
    %683 = vmatpush1.msra.mxu0 0.0
    %684 = vmatprep.subr.mxu0 0.0
    %685 = vmatpush1.msra.mxu0 0.0
    %686 = vmatprep.subr.mxu0 0.0
    %687 = vmatpush1.msra.mxu0 0.0
    %688 = vmatprep.subr.mxu0 0.0
    %689 = vmatpush1.msra.mxu0 0.0
    %690 = vmatprep.subr.mxu0 0.0
    %691 = vmatpush1.msra.mxu0 0.0
    %692 = vmatprep.subr.mxu0 0.0
    %693 = vmatpush1.msra.mxu0 0.0
    %694 = vmatprep.subr.mxu0 0.0
    %695 = vmatpush1.msra.mxu0 0.0
    %696 = vmatprep.subr.mxu0 0.0
    %697 = vmatpush1.msra.mxu0 0.0
    %698 = vmatprep.subr.mxu0 0.0
    %699 = vmatpush1.msra.mxu0 0.0
    %700 = vmatprep.subr.mxu0 0.0
    %701 = vmatpush1.msra.mxu0 0.0
    %702 = vmatprep.subr.mxu0 0.0
    %703 = vmatpush1.msra.mxu0 0.0
    %704 = vmatprep.subr.mxu0 0.0
    %705 = vmatpush1.msra.mxu0 0.0
    %706 = vmatprep.subr.mxu0 0.0
    %707 = vmatpush1.msra.mxu0 0.0
    %708 = vmatprep.subr.mxu0 0.0
    %709 = vmatpush1.msra.mxu0 0.0
    %710 = vmatprep.subr.mxu0 0.0
    %711 = vmatpush1.msra.mxu0 0.0
    %712 = vmatprep.subr.mxu0 0.0
    %713 = vmatpush1.msra.mxu0 0.0
    %714 = vmatprep.subr.mxu0 0.0
    %715 = vmatpush1.msra.mxu0 0.0
    %716 = vmatprep.subr.mxu0 0.0
    %717 = vmatpush1.msra.mxu0 0.0
    %718 = vmatprep.subr.mxu0 0.0
    %719 = vmatpush1.msra.mxu0 0.0
    %720 = vmatprep.subr.mxu0 0.0
    %721 = vmatpush1.msra.mxu0 0.0
    %722 = vmatprep.subr.mxu0 0.0
    %723 = vmatpush1.msra.mxu0 0.0
    %724 = vmatprep.subr.mxu0 0.0
    %725 = vmatpush1.msra.mxu0 0.0
    %726 = vmatprep.subr.mxu0 0.0
    %727 = vmatpush1.msra.mxu0 0.0
    %728 = vmatprep.subr.mxu0 0.0
    %729 = vmatpush1.msra.mxu0 0.0
    %730 = vmatprep.subr.mxu0 0.0
    %731 = vmatpush1.msra.mxu0 0.0
    %732 = vmatprep.subr.mxu0 0.0
    %733 = vmatpush1.msra.mxu0 0.0
    %734 = vmatprep.subr.mxu0 0.0
    %735 = vmatpush1.msra.mxu0 0.0
    %736 = vmatprep.mubr.f32.mxu0 0.0
    %737 = vmatmul.mubr.f32.gmra.mrb[0].mxu0 %v670
    %v738 = vpop.f32.mrb[0].mxu0
    %v739 = vadd.f32 0.0, %v738
    %v740 = vpop.f32.mrb[0].mxu0
    %741 = vdwg.mxu0
    %743 = vrot.lane.b32.xlu0 %v739, 127
    %v744 = vpop.permute.xlu0 %743
    %746 = vxpose.xlu0.b32.start [1/16] %v744, 128
    %747 = vxpose.xlu0.b32.cont [2/16] 0.0, 128
    %748 = vxpose.xlu0.b32.cont [3/16] 0.0, 128
    %749 = vxpose.xlu0.b32.cont [4/16] 0.0, 128
    %750 = vxpose.xlu0.b32.cont [5/16] 0.0, 128
    %751 = vxpose.xlu0.b32.cont [6/16] 0.0, 128
    %752 = vxpose.xlu0.b32.cont [7/16] 0.0, 128
    %753 = vxpose.xlu0.b32.cont [8/16] 0.0, 128
    %754 = vxpose.xlu0.b32.cont [9/16] 0.0, 128
    %755 = vxpose.xlu0.b32.cont [10/16] 0.0, 128
    %756 = vxpose.xlu0.b32.cont [11/16] 0.0, 128
    %757 = vxpose.xlu0.b32.cont [12/16] 0.0, 128
    %758 = vxpose.xlu0.b32.cont [13/16] 0.0, 128
    %759 = vxpose.xlu0.b32.cont [14/16] 0.0, 128
    %760 = vxpose.xlu0.b32.cont [15/16] 0.0, 128
    %761 = vxpose.xlu0.b32.end [16/16] 0.0, 128
    %v762 = vpop.trf.xlu0
    %v763 = vpop.trf.xlu0
    %v764 = vpop.trf.xlu0
    %v765 = vpop.trf.xlu0
    %v766 = vpop.trf.xlu0
    %v767 = vpop.trf.xlu0
    %v768 = vpop.trf.xlu0
    %v769 = vpop.trf.xlu0
    %v770 = vpop.trf.xlu0
    %v771 = vpop.trf.xlu0
    %v772 = vpop.trf.xlu0
    %v773 = vpop.trf.xlu0
    %v774 = vpop.trf.xlu0
    %v775 = vpop.trf.xlu0
    %v776 = vpop.trf.xlu0
    %v777 = vpop.trf.xlu0
    %778 = vset.pattern.permute.xlu0 0
    %779 = vperm.xlu0 %778, %v739
    %v780 = vpop.permute.xlu0 %779
    %v782 = vlaneseq
    %v783 = vshrl.u32 %v782, 7
    %v784 = vsub.s32 0, %v783
    %v785 = vrot.slane %v762, %v784
    %v786 = vadd.f32 %v780, %v785
    %v787 = vmul.f32 %v786, %v590
    %vm788 = vcmp.gt.f32.partialorder %v787, 0.0
    %v789 = vmul.f32 %v787, 0.2
    %v790 = vsel %vm788, %v787, %v789
    %v791 = vsel %vm589, %v790, -9e+15
    %v792 = vsel %vm347, %v791, -inf
    %793 = vmax.xlane.f32.xlu0 %v792
    %v794 = vpop.xlane.xlu0 %793
    %v795 = vsub.f32 %v791, %v794
    %v796 = vmul.f32 %v795, 1.442695
    %v797 = vpow.pop %v796
    %v798 = vsel %vm347, %v797, 0.0
    %799 = vadd.xlane.f32.xlu0 %v798
    %v800 = vpop.xlane.xlu0 %799
    %v801 = vrcp.pop %v800
    %v802 = vmul.f32 %v797, %v801
    %v804 = vsel %vm347, %v802, 0
    %806 = vmatprep.subr.mxu0 0.0
    %807 = vmatpush1.msra.mxu0 %v664
    %808 = vmatprep.subr.mxu0 0.0
    %809 = vmatpush1.msra.mxu0 0.0
    %810 = vmatprep.subr.mxu0 0.0
    %811 = vmatpush1.msra.mxu0 0.0
    %812 = vmatprep.subr.mxu0 0.0
    %813 = vmatpush1.msra.mxu0 0.0
    %814 = vmatprep.subr.mxu0 0.0
    %815 = vmatpush1.msra.mxu0 0.0
    %816 = vmatprep.subr.mxu0 0.0
    %817 = vmatpush1.msra.mxu0 0.0
    %818 = vmatprep.subr.mxu0 0.0
    %819 = vmatpush1.msra.mxu0 0.0
    %820 = vmatprep.subr.mxu0 0.0
    %821 = vmatpush1.msra.mxu0 0.0
    %822 = vmatprep.subr.mxu0 0.0
    %823 = vmatpush1.msra.mxu0 0.0
    %824 = vmatprep.subr.mxu0 0.0
    %825 = vmatpush1.msra.mxu0 0.0
    %826 = vmatprep.subr.mxu0 0.0
    %827 = vmatpush1.msra.mxu0 0.0
    %828 = vmatprep.subr.mxu0 0.0
    %829 = vmatpush1.msra.mxu0 0.0
    %830 = vmatprep.subr.mxu0 0.0
    %831 = vmatpush1.msra.mxu0 0.0
    %832 = vmatprep.subr.mxu0 0.0
    %833 = vmatpush1.msra.mxu0 0.0
    %834 = vmatprep.subr.mxu0 0.0
    %835 = vmatpush1.msra.mxu0 0.0
    %836 = vmatprep.subr.mxu0 0.0
    %837 = vmatpush1.msra.mxu0 0.0
    %838 = vmatprep.subr.mxu0 0.0
    %839 = vmatpush1.msra.mxu0 0.0
    %840 = vmatprep.subr.mxu0 0.0
    %841 = vmatpush1.msra.mxu0 0.0
    %842 = vmatprep.subr.mxu0 0.0
    %843 = vmatpush1.msra.mxu0 0.0
    %844 = vmatprep.subr.mxu0 0.0
    %845 = vmatpush1.msra.mxu0 0.0
    %846 = vmatprep.subr.mxu0 0.0
    %847 = vmatpush1.msra.mxu0 0.0
    %848 = vmatprep.subr.mxu0 0.0
    %849 = vmatpush1.msra.mxu0 0.0
    %850 = vmatprep.subr.mxu0 0.0
    %851 = vmatpush1.msra.mxu0 0.0
    %852 = vmatprep.subr.mxu0 0.0
    %853 = vmatpush1.msra.mxu0 0.0
    %854 = vmatprep.subr.mxu0 0.0
    %855 = vmatpush1.msra.mxu0 0.0
    %856 = vmatprep.subr.mxu0 0.0
    %857 = vmatpush1.msra.mxu0 0.0
    %858 = vmatprep.subr.mxu0 0.0
    %859 = vmatpush1.msra.mxu0 0.0
    %860 = vmatprep.subr.mxu0 0.0
    %861 = vmatpush1.msra.mxu0 0.0
    %862 = vmatprep.subr.mxu0 0.0
    %863 = vmatpush1.msra.mxu0 0.0
    %864 = vmatprep.subr.mxu0 0.0
    %865 = vmatpush1.msra.mxu0 0.0
    %866 = vmatprep.subr.mxu0 0.0
    %867 = vmatpush1.msra.mxu0 0.0
    %868 = vmatprep.subr.mxu0 0.0
    %869 = vmatpush1.msra.mxu0 0.0
    %870 = vmatprep.mubr.f32.mxu0 0.0
    %871 = vmatmul.mubr.f32.gmra.mrb[0].mxu0 %v804
    %v872 = vpop.f32.mrb[0].mxu0
    %v873 = vadd.f32 0.0, %v872
    %v874 = vpop.f32.mrb[0].mxu0
    %875 = vdwg.mxu0
    %vm876 = vcmp.gt.f32.partialorder %v873, 0.0
    %v877 = vmin.f32 %v873, 0.0
    %v878 = vmul.f32 %v877, 1.442695
    %v879 = vpow.pop %v878
    %v880 = vsub.f32 %v879, 1.0
    %v881 = vsel %vm876, %v873, %v880
    %v882 = vmul.f32 %v881, 0.5
    %v883 = vmul.f32 %v172, 0.5
    %v884 = vadd.f32 %v882, %v883
    %v885 = vld [vmem:[%s18] sm:$0xff]
    %v886 = vld [vmem:[%s18 + $0x8] sm:$0xff]
    %v888 = vsel %vm182, %v884, 0
    %890 = vmatprep.subr.mxu0 0.0
    %891 = vmatpush1.msra.mxu0 %v885
    %892 = vmatprep.subr.mxu0 0.0
    %893 = vmatpush1.msra.mxu0 %v886
    %894 = vmatprep.subr.mxu0 0.0
    %895 = vmatpush1.msra.mxu0 0.0
    %896 = vmatprep.subr.mxu0 0.0
    %897 = vmatpush1.msra.mxu0 0.0
    %898 = vmatprep.subr.mxu0 0.0
    %899 = vmatpush1.msra.mxu0 0.0
    %900 = vmatprep.subr.mxu0 0.0
    %901 = vmatpush1.msra.mxu0 0.0
    %902 = vmatprep.subr.mxu0 0.0
    %903 = vmatpush1.msra.mxu0 0.0
    %904 = vmatprep.subr.mxu0 0.0
    %905 = vmatpush1.msra.mxu0 0.0
    %906 = vmatprep.subr.mxu0 0.0
    %907 = vmatpush1.msra.mxu0 0.0
    %908 = vmatprep.subr.mxu0 0.0
    %909 = vmatpush1.msra.mxu0 0.0
    %910 = vmatprep.subr.mxu0 0.0
    %911 = vmatpush1.msra.mxu0 0.0
    %912 = vmatprep.subr.mxu0 0.0
    %913 = vmatpush1.msra.mxu0 0.0
    %914 = vmatprep.subr.mxu0 0.0
    %915 = vmatpush1.msra.mxu0 0.0
    %916 = vmatprep.subr.mxu0 0.0
    %917 = vmatpush1.msra.mxu0 0.0
    %918 = vmatprep.subr.mxu0 0.0
    %919 = vmatpush1.msra.mxu0 0.0
    %920 = vmatprep.subr.mxu0 0.0
    %921 = vmatpush1.msra.mxu0 0.0
    %922 = vmatprep.subr.mxu0 0.0
    %923 = vmatpush1.msra.mxu0 0.0
    %924 = vmatprep.subr.mxu0 0.0
    %925 = vmatpush1.msra.mxu0 0.0
    %926 = vmatprep.subr.mxu0 0.0
    %927 = vmatpush1.msra.mxu0 0.0
    %928 = vmatprep.subr.mxu0 0.0
    %929 = vmatpush1.msra.mxu0 0.0
    %930 = vmatprep.subr.mxu0 0.0
    %931 = vmatpush1.msra.mxu0 0.0
    %932 = vmatprep.subr.mxu0 0.0
    %933 = vmatpush1.msra.mxu0 0.0
    %934 = vmatprep.subr.mxu0 0.0
    %935 = vmatpush1.msra.mxu0 0.0
    %936 = vmatprep.subr.mxu0 0.0
    %937 = vmatpush1.msra.mxu0 0.0
    %938 = vmatprep.subr.mxu0 0.0
    %939 = vmatpush1.msra.mxu0 0.0
    %940 = vmatprep.subr.mxu0 0.0
    %941 = vmatpush1.msra.mxu0 0.0
    %942 = vmatprep.subr.mxu0 0.0
    %943 = vmatpush1.msra.mxu0 0.0
    %944 = vmatprep.subr.mxu0 0.0
    %945 = vmatpush1.msra.mxu0 0.0
    %946 = vmatprep.subr.mxu0 0.0
    %947 = vmatpush1.msra.mxu0 0.0
    %948 = vmatprep.subr.mxu0 0.0
    %949 = vmatpush1.msra.mxu0 0.0
    %950 = vmatprep.subr.mxu0 0.0
    %951 = vmatpush1.msra.mxu0 0.0
    %952 = vmatprep.subr.mxu0 0.0
    %953 = vmatpush1.msra.mxu0 0.0
    %954 = vmatprep.mubr.f32.mxu0 0.0
    %955 = vmatmul.mubr.f32.gmra.mrb[0].mxu0 %v888
    %v956 = vpop.f32.mrb[0].mxu0
    %v957 = vadd.f32 0.0, %v956
    %v958 = vpop.f32.mrb[0].mxu0
    %959 = vdwg.mxu0
    %v960 = vld [vmem:[%s19] sm:$0xff]
    %v961 = vld [vmem:[%s19 + $0x8] sm:$0xff]
    %v963 = vsel %vm182, %v957, 0
    %965 = vmatprep.subr.mxu0 0.0
    %966 = vmatpush1.msra.mxu0 %v960
    %967 = vmatprep.subr.mxu0 0.0
    %968 = vmatpush1.msra.mxu0 %v961
    %969 = vmatprep.subr.mxu0 0.0
    %970 = vmatpush1.msra.mxu0 0.0
    %971 = vmatprep.subr.mxu0 0.0
    %972 = vmatpush1.msra.mxu0 0.0
    %973 = vmatprep.subr.mxu0 0.0
    %974 = vmatpush1.msra.mxu0 0.0
    %975 = vmatprep.subr.mxu0 0.0
    %976 = vmatpush1.msra.mxu0 0.0
    %977 = vmatprep.subr.mxu0 0.0
    %978 = vmatpush1.msra.mxu0 0.0
    %979 = vmatprep.subr.mxu0 0.0
    %980 = vmatpush1.msra.mxu0 0.0
    %981 = vmatprep.subr.mxu0 0.0
    %982 = vmatpush1.msra.mxu0 0.0
    %983 = vmatprep.subr.mxu0 0.0
    %984 = vmatpush1.msra.mxu0 0.0
    %985 = vmatprep.subr.mxu0 0.0
    %986 = vmatpush1.msra.mxu0 0.0
    %987 = vmatprep.subr.mxu0 0.0
    %988 = vmatpush1.msra.mxu0 0.0
    %989 = vmatprep.subr.mxu0 0.0
    %990 = vmatpush1.msra.mxu0 0.0
    %991 = vmatprep.subr.mxu0 0.0
    %992 = vmatpush1.msra.mxu0 0.0
    %993 = vmatprep.subr.mxu0 0.0
    %994 = vmatpush1.msra.mxu0 0.0
    %995 = vmatprep.subr.mxu0 0.0
    %996 = vmatpush1.msra.mxu0 0.0
    %997 = vmatprep.subr.mxu0 0.0
    %998 = vmatpush1.msra.mxu0 0.0
    %999 = vmatprep.subr.mxu0 0.0
    %1000 = vmatpush1.msra.mxu0 0.0
    %1001 = vmatprep.subr.mxu0 0.0
    %1002 = vmatpush1.msra.mxu0 0.0
    %1003 = vmatprep.subr.mxu0 0.0
    %1004 = vmatpush1.msra.mxu0 0.0
    %1005 = vmatprep.subr.mxu0 0.0
    %1006 = vmatpush1.msra.mxu0 0.0
    %1007 = vmatprep.subr.mxu0 0.0
    %1008 = vmatpush1.msra.mxu0 0.0
    %1009 = vmatprep.subr.mxu0 0.0
    %1010 = vmatpush1.msra.mxu0 0.0
    %1011 = vmatprep.subr.mxu0 0.0
    %1012 = vmatpush1.msra.mxu0 0.0
    %1013 = vmatprep.subr.mxu0 0.0
    %1014 = vmatpush1.msra.mxu0 0.0
    %1015 = vmatprep.subr.mxu0 0.0
    %1016 = vmatpush1.msra.mxu0 0.0
    %1017 = vmatprep.subr.mxu0 0.0
    %1018 = vmatpush1.msra.mxu0 0.0
    %1019 = vmatprep.subr.mxu0 0.0
    %1020 = vmatpush1.msra.mxu0 0.0
    %1021 = vmatprep.subr.mxu0 0.0
    %1022 = vmatpush1.msra.mxu0 0.0
    %1023 = vmatprep.subr.mxu0 0.0
    %1024 = vmatpush1.msra.mxu0 0.0
    %1025 = vmatprep.subr.mxu0 0.0
    %1026 = vmatpush1.msra.mxu0 0.0
    %1027 = vmatprep.subr.mxu0 0.0
    %1028 = vmatpush1.msra.mxu0 0.0
    %1029 = vmatprep.mubr.f32.mxu0 0.0
    %1030 = vmatmul.mubr.f32.gmra.mrb[0].mxu0 %v963
    %v1031 = vpop.f32.mrb[0].mxu0
    %v1032 = vadd.f32 0.0, %v1031
    %v1033 = vpop.f32.mrb[0].mxu0
    %1034 = vdwg.mxu0
    %1036 = vrot.lane.b32.xlu0 %v1032, 127
    %v1037 = vpop.permute.xlu0 %1036
    %1039 = vxpose.xlu0.b32.start [1/16] %v1037, 128
    %1040 = vxpose.xlu0.b32.cont [2/16] 0.0, 128
    %1041 = vxpose.xlu0.b32.cont [3/16] 0.0, 128
    %1042 = vxpose.xlu0.b32.cont [4/16] 0.0, 128
    %1043 = vxpose.xlu0.b32.cont [5/16] 0.0, 128
    %1044 = vxpose.xlu0.b32.cont [6/16] 0.0, 128
    %1045 = vxpose.xlu0.b32.cont [7/16] 0.0, 128
    %1046 = vxpose.xlu0.b32.cont [8/16] 0.0, 128
    %1047 = vxpose.xlu0.b32.cont [9/16] 0.0, 128
    %1048 = vxpose.xlu0.b32.cont [10/16] 0.0, 128
    %1049 = vxpose.xlu0.b32.cont [11/16] 0.0, 128
    %1050 = vxpose.xlu0.b32.cont [12/16] 0.0, 128
    %1051 = vxpose.xlu0.b32.cont [13/16] 0.0, 128
    %1052 = vxpose.xlu0.b32.cont [14/16] 0.0, 128
    %1053 = vxpose.xlu0.b32.cont [15/16] 0.0, 128
    %1054 = vxpose.xlu0.b32.end [16/16] 0.0, 128
    %v1055 = vpop.trf.xlu0
    %v1056 = vpop.trf.xlu0
    %v1057 = vpop.trf.xlu0
    %v1058 = vpop.trf.xlu0
    %v1059 = vpop.trf.xlu0
    %v1060 = vpop.trf.xlu0
    %v1061 = vpop.trf.xlu0
    %v1062 = vpop.trf.xlu0
    %v1063 = vpop.trf.xlu0
    %v1064 = vpop.trf.xlu0
    %v1065 = vpop.trf.xlu0
    %v1066 = vpop.trf.xlu0
    %v1067 = vpop.trf.xlu0
    %v1068 = vpop.trf.xlu0
    %v1069 = vpop.trf.xlu0
    %v1070 = vpop.trf.xlu0
    %1071 = vset.pattern.permute.xlu0 0
    %1072 = vperm.xlu0 %1071, %v1032
    %v1073 = vpop.permute.xlu0 %1072
    %v1075 = vlaneseq
    %v1076 = vshrl.u32 %v1075, 7
    %v1077 = vsub.s32 0, %v1076
    %v1078 = vrot.slane %v1055, %v1077
    %v1079 = vadd.f32 %v1073, %v1078
    %v1080 = vmul.f32 %v1079, %v590
    %vm1081 = vcmp.gt.f32.partialorder %v1080, 0.0
    %v1082 = vmul.f32 %v1080, 0.2
    %v1083 = vsel %vm1081, %v1080, %v1082
    %v1084 = vsel %vm589, %v1083, -9e+15
    %v1085 = vsel %vm347, %v1084, -inf
    %1086 = vmax.xlane.f32.xlu0 %v1085
    %v1087 = vpop.xlane.xlu0 %1086
    %v1088 = vsub.f32 %v1084, %v1087
    %v1089 = vmul.f32 %v1088, 1.442695
    %v1090 = vpow.pop %v1089
    %v1091 = vsel %vm347, %v1090, 0.0
    %1092 = vadd.xlane.f32.xlu0 %v1091
    %v1093 = vpop.xlane.xlu0 %1092
    %v1094 = vrcp.pop %v1093
    %v1095 = vmul.f32 %v1090, %v1094
    %v1097 = vsel %vm347, %v1095, 0
    %1099 = vmatprep.subr.mxu0 0.0
    %1100 = vmatpush1.msra.mxu0 %v957
    %1101 = vmatprep.subr.mxu0 0.0
    %1102 = vmatpush1.msra.mxu0 0.0
    %1103 = vmatprep.subr.mxu0 0.0
    %1104 = vmatpush1.msra.mxu0 0.0
    %1105 = vmatprep.subr.mxu0 0.0
    %1106 = vmatpush1.msra.mxu0 0.0
    %1107 = vmatprep.subr.mxu0 0.0
    %1108 = vmatpush1.msra.mxu0 0.0
    %1109 = vmatprep.subr.mxu0 0.0
    %1110 = vmatpush1.msra.mxu0 0.0
    %1111 = vmatprep.subr.mxu0 0.0
    %1112 = vmatpush1.msra.mxu0 0.0
    %1113 = vmatprep.subr.mxu0 0.0
    %1114 = vmatpush1.msra.mxu0 0.0
    %1115 = vmatprep.subr.mxu0 0.0
    %1116 = vmatpush1.msra.mxu0 0.0
    %1117 = vmatprep.subr.mxu0 0.0
    %1118 = vmatpush1.msra.mxu0 0.0
    %1119 = vmatprep.subr.mxu0 0.0
    %1120 = vmatpush1.msra.mxu0 0.0
    %1121 = vmatprep.subr.mxu0 0.0
    %1122 = vmatpush1.msra.mxu0 0.0
    %1123 = vmatprep.subr.mxu0 0.0
    %1124 = vmatpush1.msra.mxu0 0.0
    %1125 = vmatprep.subr.mxu0 0.0
    %1126 = vmatpush1.msra.mxu0 0.0
    %1127 = vmatprep.subr.mxu0 0.0
    %1128 = vmatpush1.msra.mxu0 0.0
    %1129 = vmatprep.subr.mxu0 0.0
    %1130 = vmatpush1.msra.mxu0 0.0
    %1131 = vmatprep.subr.mxu0 0.0
    %1132 = vmatpush1.msra.mxu0 0.0
    %1133 = vmatprep.subr.mxu0 0.0
    %1134 = vmatpush1.msra.mxu0 0.0
    %1135 = vmatprep.subr.mxu0 0.0
    %1136 = vmatpush1.msra.mxu0 0.0
    %1137 = vmatprep.subr.mxu0 0.0
    %1138 = vmatpush1.msra.mxu0 0.0
    %1139 = vmatprep.subr.mxu0 0.0
    %1140 = vmatpush1.msra.mxu0 0.0
    %1141 = vmatprep.subr.mxu0 0.0
    %1142 = vmatpush1.msra.mxu0 0.0
    %1143 = vmatprep.subr.mxu0 0.0
    %1144 = vmatpush1.msra.mxu0 0.0
    %1145 = vmatprep.subr.mxu0 0.0
    %1146 = vmatpush1.msra.mxu0 0.0
    %1147 = vmatprep.subr.mxu0 0.0
    %1148 = vmatpush1.msra.mxu0 0.0
    %1149 = vmatprep.subr.mxu0 0.0
    %1150 = vmatpush1.msra.mxu0 0.0
    %1151 = vmatprep.subr.mxu0 0.0
    %1152 = vmatpush1.msra.mxu0 0.0
    %1153 = vmatprep.subr.mxu0 0.0
    %1154 = vmatpush1.msra.mxu0 0.0
    %1155 = vmatprep.subr.mxu0 0.0
    %1156 = vmatpush1.msra.mxu0 0.0
    %1157 = vmatprep.subr.mxu0 0.0
    %1158 = vmatpush1.msra.mxu0 0.0
    %1159 = vmatprep.subr.mxu0 0.0
    %1160 = vmatpush1.msra.mxu0 0.0
    %1161 = vmatprep.subr.mxu0 0.0
    %1162 = vmatpush1.msra.mxu0 0.0
    %1163 = vmatprep.mubr.f32.mxu0 0.0
    %1164 = vmatmul.mubr.f32.gmra.mrb[0].mxu0 %v1097
    %v1165 = vpop.f32.mrb[0].mxu0
    %v1166 = vadd.f32 0.0, %v1165
    %v1167 = vpop.f32.mrb[0].mxu0
    %1168 = vdwg.mxu0
    %vm1169 = vcmp.gt.f32.partialorder %v1166, 0.0
    %v1170 = vmin.f32 %v1166, 0.0
    %v1171 = vmul.f32 %v1170, 1.442695
    %v1172 = vpow.pop %v1171
    %v1173 = vsub.f32 %v1172, 1.0
    %v1174 = vsel %vm1169, %v1166, %v1173
    %v1175 = vmul.f32 %v1174, 0.5
    %v1176 = vmul.f32 %v256, 0.5
    %v1177 = vadd.f32 %v1175, %v1176
    %v1178 = vld [vmem:[%s20] sm:$0xff]
    %v1179 = vld [vmem:[%s20 + $0x8] sm:$0xff]
    %v1181 = vsel %vm182, %v1177, 0
    %1183 = vmatprep.subr.mxu0 0.0
    %1184 = vmatpush1.msra.mxu0 %v1178
    %1185 = vmatprep.subr.mxu0 0.0
    %1186 = vmatpush1.msra.mxu0 %v1179
    %1187 = vmatprep.subr.mxu0 0.0
    %1188 = vmatpush1.msra.mxu0 0.0
    %1189 = vmatprep.subr.mxu0 0.0
    %1190 = vmatpush1.msra.mxu0 0.0
    %1191 = vmatprep.subr.mxu0 0.0
    %1192 = vmatpush1.msra.mxu0 0.0
    %1193 = vmatprep.subr.mxu0 0.0
    %1194 = vmatpush1.msra.mxu0 0.0
    %1195 = vmatprep.subr.mxu0 0.0
    %1196 = vmatpush1.msra.mxu0 0.0
    %1197 = vmatprep.subr.mxu0 0.0
    %1198 = vmatpush1.msra.mxu0 0.0
    %1199 = vmatprep.subr.mxu0 0.0
    %1200 = vmatpush1.msra.mxu0 0.0
    %1201 = vmatprep.subr.mxu0 0.0
    %1202 = vmatpush1.msra.mxu0 0.0
    %1203 = vmatprep.subr.mxu0 0.0
    %1204 = vmatpush1.msra.mxu0 0.0
    %1205 = vmatprep.subr.mxu0 0.0
    %1206 = vmatpush1.msra.mxu0 0.0
    %1207 = vmatprep.subr.mxu0 0.0
    %1208 = vmatpush1.msra.mxu0 0.0
    %1209 = vmatprep.subr.mxu0 0.0
    %1210 = vmatpush1.msra.mxu0 0.0
    %1211 = vmatprep.subr.mxu0 0.0
    %1212 = vmatpush1.msra.mxu0 0.0
    %1213 = vmatprep.subr.mxu0 0.0
    %1214 = vmatpush1.msra.mxu0 0.0
    %1215 = vmatprep.subr.mxu0 0.0
    %1216 = vmatpush1.msra.mxu0 0.0
    %1217 = vmatprep.subr.mxu0 0.0
    %1218 = vmatpush1.msra.mxu0 0.0
    %1219 = vmatprep.subr.mxu0 0.0
    %1220 = vmatpush1.msra.mxu0 0.0
    %1221 = vmatprep.subr.mxu0 0.0
    %1222 = vmatpush1.msra.mxu0 0.0
    %1223 = vmatprep.subr.mxu0 0.0
    %1224 = vmatpush1.msra.mxu0 0.0
    %1225 = vmatprep.subr.mxu0 0.0
    %1226 = vmatpush1.msra.mxu0 0.0
    %1227 = vmatprep.subr.mxu0 0.0
    %1228 = vmatpush1.msra.mxu0 0.0
    %1229 = vmatprep.subr.mxu0 0.0
    %1230 = vmatpush1.msra.mxu0 0.0
    %1231 = vmatprep.subr.mxu0 0.0
    %1232 = vmatpush1.msra.mxu0 0.0
    %1233 = vmatprep.subr.mxu0 0.0
    %1234 = vmatpush1.msra.mxu0 0.0
    %1235 = vmatprep.subr.mxu0 0.0
    %1236 = vmatpush1.msra.mxu0 0.0
    %1237 = vmatprep.subr.mxu0 0.0
    %1238 = vmatpush1.msra.mxu0 0.0
    %1239 = vmatprep.subr.mxu0 0.0
    %1240 = vmatpush1.msra.mxu0 0.0
    %1241 = vmatprep.subr.mxu0 0.0
    %1242 = vmatpush1.msra.mxu0 0.0
    %1243 = vmatprep.subr.mxu0 0.0
    %1244 = vmatpush1.msra.mxu0 0.0
    %1245 = vmatprep.subr.mxu0 0.0
    %1246 = vmatpush1.msra.mxu0 0.0
    %1247 = vmatprep.mubr.f32.mxu0 0.0
    %1248 = vmatmul.mubr.f32.gmra.mrb[0].mxu0 %v1181
    %v1249 = vpop.f32.mrb[0].mxu0
    %v1250 = vadd.f32 0.0, %v1249
    %v1251 = vpop.f32.mrb[0].mxu0
    %1252 = vdwg.mxu0
    %v1253 = vld [vmem:[%s21] sm:$0xff]
    %v1255 = vsel %vm347, %v1250, 0
    %1257 = vmatprep.subr.mxu0 0.0
    %1258 = vmatpush1.msra.mxu0 %v1253
    %1259 = vmatprep.subr.mxu0 0.0
    %1260 = vmatpush1.msra.mxu0 0.0
    %1261 = vmatprep.subr.mxu0 0.0
    %1262 = vmatpush1.msra.mxu0 0.0
    %1263 = vmatprep.subr.mxu0 0.0
    %1264 = vmatpush1.msra.mxu0 0.0
    %1265 = vmatprep.subr.mxu0 0.0
    %1266 = vmatpush1.msra.mxu0 0.0
    %1267 = vmatprep.subr.mxu0 0.0
    %1268 = vmatpush1.msra.mxu0 0.0
    %1269 = vmatprep.subr.mxu0 0.0
    %1270 = vmatpush1.msra.mxu0 0.0
    %1271 = vmatprep.subr.mxu0 0.0
    %1272 = vmatpush1.msra.mxu0 0.0
    %1273 = vmatprep.subr.mxu0 0.0
    %1274 = vmatpush1.msra.mxu0 0.0
    %1275 = vmatprep.subr.mxu0 0.0
    %1276 = vmatpush1.msra.mxu0 0.0
    %1277 = vmatprep.subr.mxu0 0.0
    %1278 = vmatpush1.msra.mxu0 0.0
    %1279 = vmatprep.subr.mxu0 0.0
    %1280 = vmatpush1.msra.mxu0 0.0
    %1281 = vmatprep.subr.mxu0 0.0
    %1282 = vmatpush1.msra.mxu0 0.0
    %1283 = vmatprep.subr.mxu0 0.0
    %1284 = vmatpush1.msra.mxu0 0.0
    %1285 = vmatprep.subr.mxu0 0.0
    %1286 = vmatpush1.msra.mxu0 0.0
    %1287 = vmatprep.subr.mxu0 0.0
    %1288 = vmatpush1.msra.mxu0 0.0
    %1289 = vmatprep.subr.mxu0 0.0
    %1290 = vmatpush1.msra.mxu0 0.0
    %1291 = vmatprep.subr.mxu0 0.0
    %1292 = vmatpush1.msra.mxu0 0.0
    %1293 = vmatprep.subr.mxu0 0.0
    %1294 = vmatpush1.msra.mxu0 0.0
    %1295 = vmatprep.subr.mxu0 0.0
    %1296 = vmatpush1.msra.mxu0 0.0
    %1297 = vmatprep.subr.mxu0 0.0
    %1298 = vmatpush1.msra.mxu0 0.0
    %1299 = vmatprep.subr.mxu0 0.0
    %1300 = vmatpush1.msra.mxu0 0.0
    %1301 = vmatprep.subr.mxu0 0.0
    %1302 = vmatpush1.msra.mxu0 0.0
    %1303 = vmatprep.subr.mxu0 0.0
    %1304 = vmatpush1.msra.mxu0 0.0
    %1305 = vmatprep.subr.mxu0 0.0
    %1306 = vmatpush1.msra.mxu0 0.0
    %1307 = vmatprep.subr.mxu0 0.0
    %1308 = vmatpush1.msra.mxu0 0.0
    %1309 = vmatprep.subr.mxu0 0.0
    %1310 = vmatpush1.msra.mxu0 0.0
    %1311 = vmatprep.subr.mxu0 0.0
    %1312 = vmatpush1.msra.mxu0 0.0
    %1313 = vmatprep.subr.mxu0 0.0
    %1314 = vmatpush1.msra.mxu0 0.0
    %1315 = vmatprep.subr.mxu0 0.0
    %1316 = vmatpush1.msra.mxu0 0.0
    %1317 = vmatprep.subr.mxu0 0.0
    %1318 = vmatpush1.msra.mxu0 0.0
    %1319 = vmatprep.subr.mxu0 0.0
    %1320 = vmatpush1.msra.mxu0 0.0
    %1321 = vmatprep.mubr.f32.mxu0 0.0
    %1322 = vmatmul.mubr.f32.gmra.mrb[0].mxu0 %v1255
    %v1323 = vpop.f32.mrb[0].mxu0
    %v1324 = vadd.f32 0.0, %v1323
    %v1325 = vpop.f32.mrb[0].mxu0
    %1326 = vdwg.mxu0
    %1328 = vrot.lane.b32.xlu0 %v1324, 127
    %v1329 = vpop.permute.xlu0 %1328
    %1331 = vxpose.xlu0.b32.start [1/16] %v1329, 128
    %1332 = vxpose.xlu0.b32.cont [2/16] 0.0, 128
    %1333 = vxpose.xlu0.b32.cont [3/16] 0.0, 128
    %1334 = vxpose.xlu0.b32.cont [4/16] 0.0, 128
    %1335 = vxpose.xlu0.b32.cont [5/16] 0.0, 128
    %1336 = vxpose.xlu0.b32.cont [6/16] 0.0, 128
    %1337 = vxpose.xlu0.b32.cont [7/16] 0.0, 128
    %1338 = vxpose.xlu0.b32.cont [8/16] 0.0, 128
    %1339 = vxpose.xlu0.b32.cont [9/16] 0.0, 128
    %1340 = vxpose.xlu0.b32.cont [10/16] 0.0, 128
    %1341 = vxpose.xlu0.b32.cont [11/16] 0.0, 128
    %1342 = vxpose.xlu0.b32.cont [12/16] 0.0, 128
    %1343 = vxpose.xlu0.b32.cont [13/16] 0.0, 128
    %1344 = vxpose.xlu0.b32.cont [14/16] 0.0, 128
    %1345 = vxpose.xlu0.b32.cont [15/16] 0.0, 128
    %1346 = vxpose.xlu0.b32.end [16/16] 0.0, 128
    %v1347 = vpop.trf.xlu0
    %v1348 = vpop.trf.xlu0
    %v1349 = vpop.trf.xlu0
    %v1350 = vpop.trf.xlu0
    %v1351 = vpop.trf.xlu0
    %v1352 = vpop.trf.xlu0
    %v1353 = vpop.trf.xlu0
    %v1354 = vpop.trf.xlu0
    %v1355 = vpop.trf.xlu0
    %v1356 = vpop.trf.xlu0
    %v1357 = vpop.trf.xlu0
    %v1358 = vpop.trf.xlu0
    %v1359 = vpop.trf.xlu0
    %v1360 = vpop.trf.xlu0
    %v1361 = vpop.trf.xlu0
    %v1362 = vpop.trf.xlu0
    %1363 = vset.pattern.permute.xlu0 0
    %1364 = vperm.xlu0 %1363, %v1324
    %v1365 = vpop.permute.xlu0 %1364
    %v1367 = vlaneseq
    %v1368 = vshrl.u32 %v1367, 7
    %v1369 = vsub.s32 0, %v1368
    %v1370 = vrot.slane %v1347, %v1369
    %v1371 = vadd.f32 %v1365, %v1370
    %v1372 = vmul.f32 %v1371, %v590
    %vm1373 = vcmp.gt.f32.partialorder %v1372, 0.0
    %v1374 = vmul.f32 %v1372, 0.2
    %v1375 = vsel %vm1373, %v1372, %v1374
    %v1376 = vsel %vm589, %v1375, -9e+15
    %v1377 = vsel %vm347, %v1376, -inf
    %1378 = vmax.xlane.f32.xlu0 %v1377
    %v1379 = vpop.xlane.xlu0 %1378
    %v1380 = vsub.f32 %v1376, %v1379
    %v1381 = vmul.f32 %v1380, 1.442695
    %v1382 = vpow.pop %v1381
    %v1383 = vsel %vm347, %v1382, 0.0
    %1384 = vadd.xlane.f32.xlu0 %v1383
    %v1385 = vpop.xlane.xlu0 %1384
    %v1386 = vrcp.pop %v1385
    %v1387 = vmul.f32 %v1382, %v1386
    %v1389 = vsel %vm347, %v1387, 0
    %1391 = vmatprep.subr.mxu0 0.0
    %1392 = vmatpush1.msra.mxu0 %v1250
    %1393 = vmatprep.subr.mxu0 0.0
    %1394 = vmatpush1.msra.mxu0 0.0
    %1395 = vmatprep.subr.mxu0 0.0
    %1396 = vmatpush1.msra.mxu0 0.0
    %1397 = vmatprep.subr.mxu0 0.0
    %1398 = vmatpush1.msra.mxu0 0.0
    %1399 = vmatprep.subr.mxu0 0.0
    %1400 = vmatpush1.msra.mxu0 0.0
    %1401 = vmatprep.subr.mxu0 0.0
    %1402 = vmatpush1.msra.mxu0 0.0
    %1403 = vmatprep.subr.mxu0 0.0
    %1404 = vmatpush1.msra.mxu0 0.0
    %1405 = vmatprep.subr.mxu0 0.0
    %1406 = vmatpush1.msra.mxu0 0.0
    %1407 = vmatprep.subr.mxu0 0.0
    %1408 = vmatpush1.msra.mxu0 0.0
    %1409 = vmatprep.subr.mxu0 0.0
    %1410 = vmatpush1.msra.mxu0 0.0
    %1411 = vmatprep.subr.mxu0 0.0
    %1412 = vmatpush1.msra.mxu0 0.0
    %1413 = vmatprep.subr.mxu0 0.0
    %1414 = vmatpush1.msra.mxu0 0.0
    %1415 = vmatprep.subr.mxu0 0.0
    %1416 = vmatpush1.msra.mxu0 0.0
    %1417 = vmatprep.subr.mxu0 0.0
    %1418 = vmatpush1.msra.mxu0 0.0
    %1419 = vmatprep.subr.mxu0 0.0
    %1420 = vmatpush1.msra.mxu0 0.0
    %1421 = vmatprep.subr.mxu0 0.0
    %1422 = vmatpush1.msra.mxu0 0.0
    %1423 = vmatprep.subr.mxu0 0.0
    %1424 = vmatpush1.msra.mxu0 0.0
    %1425 = vmatprep.subr.mxu0 0.0
    %1426 = vmatpush1.msra.mxu0 0.0
    %1427 = vmatprep.subr.mxu0 0.0
    %1428 = vmatpush1.msra.mxu0 0.0
    %1429 = vmatprep.subr.mxu0 0.0
    %1430 = vmatpush1.msra.mxu0 0.0
    %1431 = vmatprep.subr.mxu0 0.0
    %1432 = vmatpush1.msra.mxu0 0.0
    %1433 = vmatprep.subr.mxu0 0.0
    %1434 = vmatpush1.msra.mxu0 0.0
    %1435 = vmatprep.subr.mxu0 0.0
    %1436 = vmatpush1.msra.mxu0 0.0
    %1437 = vmatprep.subr.mxu0 0.0
    %1438 = vmatpush1.msra.mxu0 0.0
    %1439 = vmatprep.subr.mxu0 0.0
    %1440 = vmatpush1.msra.mxu0 0.0
    %1441 = vmatprep.subr.mxu0 0.0
    %1442 = vmatpush1.msra.mxu0 0.0
    %1443 = vmatprep.subr.mxu0 0.0
    %1444 = vmatpush1.msra.mxu0 0.0
    %1445 = vmatprep.subr.mxu0 0.0
    %1446 = vmatpush1.msra.mxu0 0.0
    %1447 = vmatprep.subr.mxu0 0.0
    %1448 = vmatpush1.msra.mxu0 0.0
    %1449 = vmatprep.subr.mxu0 0.0
    %1450 = vmatpush1.msra.mxu0 0.0
    %1451 = vmatprep.subr.mxu0 0.0
    %1452 = vmatpush1.msra.mxu0 0.0
    %1453 = vmatprep.subr.mxu0 0.0
    %1454 = vmatpush1.msra.mxu0 0.0
    %1455 = vmatprep.mubr.f32.mxu0 0.0
    %1456 = vmatmul.mubr.f32.gmra.mrb[0].mxu0 %v1389
    %v1457 = vpop.f32.mrb[0].mxu0
    %v1458 = vadd.f32 0.0, %v1457
    %v1459 = vpop.f32.mrb[0].mxu0
    %1460 = vdwg.mxu0
    %vm1461 = vcmp.gt.f32.partialorder %v1458, 0.0
    %v1462 = vmin.f32 %v1458, 0.0
    %v1463 = vmul.f32 %v1462, 1.442695
    %v1464 = vpow.pop %v1463
    %v1465 = vsub.f32 %v1464, 1.0
    %v1466 = vsel %vm1461, %v1458, %v1465
    %v1467 = vmul.f32 %v1466, 0.5
    %v1468 = vmul.f32 %v336, 0.5
    %v1469 = vadd.f32 %v1467, %v1468
    %1470 = vst.msk [vmem:[#allocation4] sm:$0xff] %vm347, %v1469
    %v1471 = vld [vmem:[%s22] sm:$0xff]
    %v1473 = vsel %vm347, %v1469, 0
    %1475 = vmatprep.subr.mxu0 0.0
    %1476 = vmatpush1.msra.mxu0 %v1471
    %1477 = vmatprep.subr.mxu0 0.0
    %1478 = vmatpush1.msra.mxu0 0.0
    %1479 = vmatprep.subr.mxu0 0.0
    %1480 = vmatpush1.msra.mxu0 0.0
    %1481 = vmatprep.subr.mxu0 0.0
    %1482 = vmatpush1.msra.mxu0 0.0
    %1483 = vmatprep.subr.mxu0 0.0
    %1484 = vmatpush1.msra.mxu0 0.0
    %1485 = vmatprep.subr.mxu0 0.0
    %1486 = vmatpush1.msra.mxu0 0.0
    %1487 = vmatprep.subr.mxu0 0.0
    %1488 = vmatpush1.msra.mxu0 0.0
    %1489 = vmatprep.subr.mxu0 0.0
    %1490 = vmatpush1.msra.mxu0 0.0
    %1491 = vmatprep.subr.mxu0 0.0
    %1492 = vmatpush1.msra.mxu0 0.0
    %1493 = vmatprep.subr.mxu0 0.0
    %1494 = vmatpush1.msra.mxu0 0.0
    %1495 = vmatprep.subr.mxu0 0.0
    %1496 = vmatpush1.msra.mxu0 0.0
    %1497 = vmatprep.subr.mxu0 0.0
    %1498 = vmatpush1.msra.mxu0 0.0
    %1499 = vmatprep.subr.mxu0 0.0
    %1500 = vmatpush1.msra.mxu0 0.0
    %1501 = vmatprep.subr.mxu0 0.0
    %1502 = vmatpush1.msra.mxu0 0.0
    %1503 = vmatprep.subr.mxu0 0.0
    %1504 = vmatpush1.msra.mxu0 0.0
    %1505 = vmatprep.subr.mxu0 0.0
    %1506 = vmatpush1.msra.mxu0 0.0
    %1507 = vmatprep.subr.mxu0 0.0
    %1508 = vmatpush1.msra.mxu0 0.0
    %1509 = vmatprep.subr.mxu0 0.0
    %1510 = vmatpush1.msra.mxu0 0.0
    %1511 = vmatprep.subr.mxu0 0.0
    %1512 = vmatpush1.msra.mxu0 0.0
    %1513 = vmatprep.subr.mxu0 0.0
    %1514 = vmatpush1.msra.mxu0 0.0
    %1515 = vmatprep.subr.mxu0 0.0
    %1516 = vmatpush1.msra.mxu0 0.0
    %1517 = vmatprep.subr.mxu0 0.0
    %1518 = vmatpush1.msra.mxu0 0.0
    %1519 = vmatprep.subr.mxu0 0.0
    %1520 = vmatpush1.msra.mxu0 0.0
    %1521 = vmatprep.subr.mxu0 0.0
    %1522 = vmatpush1.msra.mxu0 0.0
    %1523 = vmatprep.subr.mxu0 0.0
    %1524 = vmatpush1.msra.mxu0 0.0
    %1525 = vmatprep.subr.mxu0 0.0
    %1526 = vmatpush1.msra.mxu0 0.0
    %1527 = vmatprep.subr.mxu0 0.0
    %1528 = vmatpush1.msra.mxu0 0.0
    %1529 = vmatprep.subr.mxu0 0.0
    %1530 = vmatpush1.msra.mxu0 0.0
    %1531 = vmatprep.subr.mxu0 0.0
    %1532 = vmatpush1.msra.mxu0 0.0
    %1533 = vmatprep.subr.mxu0 0.0
    %1534 = vmatpush1.msra.mxu0 0.0
    %1535 = vmatprep.subr.mxu0 0.0
    %1536 = vmatpush1.msra.mxu0 0.0
    %1537 = vmatprep.subr.mxu0 0.0
    %1538 = vmatpush1.msra.mxu0 0.0
    %1539 = vmatprep.mubr.f32.mxu0 0.0
    %1540 = vmatmul.mubr.f32.gmra.mrb[0].mxu0 %v1473
    %v1541 = vpop.f32.mrb[0].mxu0
    %v1542 = vadd.f32 0.0, %v1541
    %v1543 = vpop.f32.mrb[0].mxu0
    %1544 = vdwg.mxu0
    %v1545 = vld [vmem:[%s23] sm:$0xf]
    %vm1546 = vcmask 31744
    %v1548 = vsel %vm1546, %v1542, 0
    %vm1550 = vcmask 1043456
    %v1552 = vsel %vm1550, %v1545, 0
    %1554 = vmatprep.subr.mxu0 0.0
    %1555 = vmatpush1.msra.mxu0 %v1552
    %1556 = vmatprep.subr.mxu0 0.0
    %1557 = vmatpush1.msra.mxu0 0.0
    %1558 = vmatprep.subr.mxu0 0.0
    %1559 = vmatpush1.msra.mxu0 0.0
    %1560 = vmatprep.subr.mxu0 0.0
    %1561 = vmatpush1.msra.mxu0 0.0
    %1562 = vmatprep.subr.mxu0 0.0
    %1563 = vmatpush1.msra.mxu0 0.0
    %1564 = vmatprep.subr.mxu0 0.0
    %1565 = vmatpush1.msra.mxu0 0.0
    %1566 = vmatprep.subr.mxu0 0.0
    %1567 = vmatpush1.msra.mxu0 0.0
    %1568 = vmatprep.subr.mxu0 0.0
    %1569 = vmatpush1.msra.mxu0 0.0
    %1570 = vmatprep.subr.mxu0 0.0
    %1571 = vmatpush1.msra.mxu0 0.0
    %1572 = vmatprep.subr.mxu0 0.0
    %1573 = vmatpush1.msra.mxu0 0.0
    %1574 = vmatprep.subr.mxu0 0.0
    %1575 = vmatpush1.msra.mxu0 0.0
    %1576 = vmatprep.subr.mxu0 0.0
    %1577 = vmatpush1.msra.mxu0 0.0
    %1578 = vmatprep.subr.mxu0 0.0
    %1579 = vmatpush1.msra.mxu0 0.0
    %1580 = vmatprep.subr.mxu0 0.0
    %1581 = vmatpush1.msra.mxu0 0.0
    %1582 = vmatprep.subr.mxu0 0.0
    %1583 = vmatpush1.msra.mxu0 0.0
    %1584 = vmatprep.subr.mxu0 0.0
    %1585 = vmatpush1.msra.mxu0 0.0
    %1586 = vmatprep.subr.mxu0 0.0
    %1587 = vmatpush1.msra.mxu0 0.0
    %1588 = vmatprep.subr.mxu0 0.0
    %1589 = vmatpush1.msra.mxu0 0.0
    %1590 = vmatprep.subr.mxu0 0.0
    %1591 = vmatpush1.msra.mxu0 0.0
    %1592 = vmatprep.subr.mxu0 0.0
    %1593 = vmatpush1.msra.mxu0 0.0
    %1594 = vmatprep.subr.mxu0 0.0
    %1595 = vmatpush1.msra.mxu0 0.0
    %1596 = vmatprep.subr.mxu0 0.0
    %1597 = vmatpush1.msra.mxu0 0.0
    %1598 = vmatprep.subr.mxu0 0.0
    %1599 = vmatpush1.msra.mxu0 0.0
    %1600 = vmatprep.subr.mxu0 0.0
    %1601 = vmatpush1.msra.mxu0 0.0
    %1602 = vmatprep.subr.mxu0 0.0
    %1603 = vmatpush1.msra.mxu0 0.0
    %1604 = vmatprep.subr.mxu0 0.0
    %1605 = vmatpush1.msra.mxu0 0.0
    %1606 = vmatprep.subr.mxu0 0.0
    %1607 = vmatpush1.msra.mxu0 0.0
    %1608 = vmatprep.subr.mxu0 0.0
    %1609 = vmatpush1.msra.mxu0 0.0
    %1610 = vmatprep.subr.mxu0 0.0
    %1611 = vmatpush1.msra.mxu0 0.0
    %1612 = vmatprep.subr.mxu0 0.0
    %1613 = vmatpush1.msra.mxu0 0.0
    %1614 = vmatprep.subr.mxu0 0.0
    %1615 = vmatpush1.msra.mxu0 0.0
    %1616 = vmatprep.subr.mxu0 0.0
    %1617 = vmatpush1.msra.mxu0 0.0
    %1618 = vmatprep.mubr.f32.mxu0 0.0
    %1619 = vmatmul.mubr.f32.gmra.mrb[0].mxu0 %v1548
    %v1620 = vpop.f32.mrb[0].mxu0
    %v1621 = vadd.f32 0.0, %v1620
    %v1622 = vpop.f32.mrb[0].mxu0
    %1623 = vdwg.mxu0
    %1625 = vrot.lane.b32.xlu0 %v1621, 127
    %v1626 = vpop.permute.xlu0 %1625
    %1628 = vxpose.xlu0.b32.start [1/16] %v1626, 128
    %1629 = vxpose.xlu0.b32.cont [2/16] 0.0, 128
    %1630 = vxpose.xlu0.b32.cont [3/16] 0.0, 128
    %1631 = vxpose.xlu0.b32.cont [4/16] 0.0, 128
    %1632 = vxpose.xlu0.b32.cont [5/16] 0.0, 128
    %1633 = vxpose.xlu0.b32.cont [6/16] 0.0, 128
    %1634 = vxpose.xlu0.b32.cont [7/16] 0.0, 128
    %1635 = vxpose.xlu0.b32.cont [8/16] 0.0, 128
    %1636 = vxpose.xlu0.b32.cont [9/16] 0.0, 128
    %1637 = vxpose.xlu0.b32.cont [10/16] 0.0, 128
    %1638 = vxpose.xlu0.b32.cont [11/16] 0.0, 128
    %1639 = vxpose.xlu0.b32.cont [12/16] 0.0, 128
    %1640 = vxpose.xlu0.b32.cont [13/16] 0.0, 128
    %1641 = vxpose.xlu0.b32.cont [14/16] 0.0, 128
    %1642 = vxpose.xlu0.b32.cont [15/16] 0.0, 128
    %1643 = vxpose.xlu0.b32.end [16/16] 0.0, 128
    %v1644 = vpop.trf.xlu0
    %v1645 = vpop.trf.xlu0
    %v1646 = vpop.trf.xlu0
    %v1647 = vpop.trf.xlu0
    %v1648 = vpop.trf.xlu0
    %v1649 = vpop.trf.xlu0
    %v1650 = vpop.trf.xlu0
    %v1651 = vpop.trf.xlu0
    %v1652 = vpop.trf.xlu0
    %v1653 = vpop.trf.xlu0
    %v1654 = vpop.trf.xlu0
    %v1655 = vpop.trf.xlu0
    %v1656 = vpop.trf.xlu0
    %v1657 = vpop.trf.xlu0
    %v1658 = vpop.trf.xlu0
    %v1659 = vpop.trf.xlu0
    %1660 = vset.pattern.permute.xlu0 0
    %1661 = vperm.xlu0 %1660, %v1621
    %v1662 = vpop.permute.xlu0 %1661
    %v1664 = vlaneseq
    %v1665 = vshrl.u32 %v1664, 7
    %v1666 = vsub.s32 0, %v1665
    %v1667 = vrot.slane %v1644, %v1666
    %v1668 = vadd.f32 %v1662, %v1667
    %v1669 = vmul.f32 %v1668, %v590
    %vm1670 = vcmp.gt.f32.partialorder %v1669, 0.0
    %v1671 = vmul.f32 %v1669, 0.2
    %v1672 = vsel %vm1670, %v1669, %v1671
    %v1673 = vsel %vm589, %v1672, -9e+15
    %v1674 = vsel %vm347, %v1673, -inf
    %1675 = vmax.xlane.f32.xlu0 %v1674
    %v1676 = vpop.xlane.xlu0 %1675
    %v1677 = vsub.f32 %v1673, %v1676
    %v1678 = vmul.f32 %v1677, 1.442695
    %v1679 = vpow.pop %v1678
    %v1680 = vsel %vm347, %v1679, 0.0
    %1681 = vadd.xlane.f32.xlu0 %v1680
    %v1682 = vpop.xlane.xlu0 %1681
    %v1683 = vrcp.pop %v1682
    %v1684 = vmul.f32 %v1679, %v1683
    %v1686 = vsel %vm347, %v1684, 0
    %1688 = vmatprep.subr.mxu0 0.0
    %1689 = vmatpush1.msra.mxu0 %v1542
    %1690 = vmatprep.subr.mxu0 0.0
    %1691 = vmatpush1.msra.mxu0 0.0
    %1692 = vmatprep.subr.mxu0 0.0
    %1693 = vmatpush1.msra.mxu0 0.0
    %1694 = vmatprep.subr.mxu0 0.0
    %1695 = vmatpush1.msra.mxu0 0.0
    %1696 = vmatprep.subr.mxu0 0.0
    %1697 = vmatpush1.msra.mxu0 0.0
    %1698 = vmatprep.subr.mxu0 0.0
    %1699 = vmatpush1.msra.mxu0 0.0
    %1700 = vmatprep.subr.mxu0 0.0
    %1701 = vmatpush1.msra.mxu0 0.0
    %1702 = vmatprep.subr.mxu0 0.0
    %1703 = vmatpush1.msra.mxu0 0.0
    %1704 = vmatprep.subr.mxu0 0.0
    %1705 = vmatpush1.msra.mxu0 0.0
    %1706 = vmatprep.subr.mxu0 0.0
    %1707 = vmatpush1.msra.mxu0 0.0
    %1708 = vmatprep.subr.mxu0 0.0
    %1709 = vmatpush1.msra.mxu0 0.0
    %1710 = vmatprep.subr.mxu0 0.0
    %1711 = vmatpush1.msra.mxu0 0.0
    %1712 = vmatprep.subr.mxu0 0.0
    %1713 = vmatpush1.msra.mxu0 0.0
    %1714 = vmatprep.subr.mxu0 0.0
    %1715 = vmatpush1.msra.mxu0 0.0
    %1716 = vmatprep.subr.mxu0 0.0
    %1717 = vmatpush1.msra.mxu0 0.0
    %1718 = vmatprep.subr.mxu0 0.0
    %1719 = vmatpush1.msra.mxu0 0.0
    %1720 = vmatprep.subr.mxu0 0.0
    %1721 = vmatpush1.msra.mxu0 0.0
    %1722 = vmatprep.subr.mxu0 0.0
    %1723 = vmatpush1.msra.mxu0 0.0
    %1724 = vmatprep.subr.mxu0 0.0
    %1725 = vmatpush1.msra.mxu0 0.0
    %1726 = vmatprep.subr.mxu0 0.0
    %1727 = vmatpush1.msra.mxu0 0.0
    %1728 = vmatprep.subr.mxu0 0.0
    %1729 = vmatpush1.msra.mxu0 0.0
    %1730 = vmatprep.subr.mxu0 0.0
    %1731 = vmatpush1.msra.mxu0 0.0
    %1732 = vmatprep.subr.mxu0 0.0
    %1733 = vmatpush1.msra.mxu0 0.0
    %1734 = vmatprep.subr.mxu0 0.0
    %1735 = vmatpush1.msra.mxu0 0.0
    %1736 = vmatprep.subr.mxu0 0.0
    %1737 = vmatpush1.msra.mxu0 0.0
    %1738 = vmatprep.subr.mxu0 0.0
    %1739 = vmatpush1.msra.mxu0 0.0
    %1740 = vmatprep.subr.mxu0 0.0
    %1741 = vmatpush1.msra.mxu0 0.0
    %1742 = vmatprep.subr.mxu0 0.0
    %1743 = vmatpush1.msra.mxu0 0.0
    %1744 = vmatprep.subr.mxu0 0.0
    %1745 = vmatpush1.msra.mxu0 0.0
    %1746 = vmatprep.subr.mxu0 0.0
    %1747 = vmatpush1.msra.mxu0 0.0
    %1748 = vmatprep.subr.mxu0 0.0
    %1749 = vmatpush1.msra.mxu0 0.0
    %1750 = vmatprep.subr.mxu0 0.0
    %1751 = vmatpush1.msra.mxu0 0.0
    %1752 = vmatprep.mubr.f32.mxu0 0.0
    %1753 = vmatmul.mubr.f32.gmra.mrb[0].mxu0 %v1686
    %v1754 = vpop.f32.mrb[0].mxu0
    %v1755 = vadd.f32 0.0, %v1754
    %v1756 = vpop.f32.mrb[0].mxu0
    %1757 = vdwg.mxu0
    %vm1758 = vcmp.gt.f32.partialorder %v1755, 0.0
    %v1759 = vmin.f32 %v1755, 0.0
    %v1760 = vmul.f32 %v1759, 1.442695
    %v1761 = vpow.pop %v1760
    %v1762 = vsub.f32 %v1761, 1.0
    %v1763 = vsel %vm1758, %v1755, %v1762
    %v1764 = vsel %vm1546, %v1763, -inf
    %1765 = vmax.xlane.f32.xlu0 %v1764
    %v1766 = vpop.xlane.xlu0 %1765
    %v1767 = vsub.f32 %v1763, %v1766
    %v1768 = vmul.f32 %v1767, 1.442695
    %v1769 = vpow.pop %v1768
    %v1770 = vsel %vm1546, %v1769, 0.0
    %1771 = vadd.xlane.f32.xlu0 %v1770
    %v1772 = vpop.xlane.xlu0 %1771
    %v1773 = vrcp.pop %v1772
    %v1774 = vmul.f32 %v1769, %v1773
    %1775 = vst.msk [vmem:[%s27] sm:$0xff] %vm1546, %v1774
    %v1776 = vld [vmem:[%s24] sm:$0xff]
    %v1777 = vmul.f32 %v336, %v336
    %v1778 = vsel %vm347, %v1777, 0.0
    %1779 = vadd.xlane.f32.xlu0 %v1778
    %v1780 = vpop.xlane.xlu0 %1779
    %v1781 = vmul.f32 %v1776, %v1776
    %v1782 = vsel %vm1546, %v1781, 0.0
    %v1783 = vrot.slane %v1782, 4
    %v1784 = vadd.f32 %v1782, %v1783
    %v1785 = vrot.slane %v1784, 2
    %v1786 = vadd.f32 %v1784, %v1785
    %v1787 = vrot.slane %v1786, 1
    %v1788 = vadd.f32 %v1786, %v1787
    %1789 = vmatprep.subr.mxu0 0.0
    %1790 = vmatpush1.msra.mxu0 %v1776
    %1791 = vmatprep.subr.mxu0 0.0
    %1792 = vmatpush1.msra.mxu0 0.0
    %1793 = vmatprep.subr.mxu0 0.0
    %1794 = vmatpush1.msra.mxu0 0.0
    %1795 = vmatprep.subr.mxu0 0.0
    %1796 = vmatpush1.msra.mxu0 0.0
    %1797 = vmatprep.subr.mxu0 0.0
    %1798 = vmatpush1.msra.mxu0 0.0
    %1799 = vmatprep.subr.mxu0 0.0
    %1800 = vmatpush1.msra.mxu0 0.0
    %1801 = vmatprep.subr.mxu0 0.0
    %1802 = vmatpush1.msra.mxu0 0.0
    %1803 = vmatprep.subr.mxu0 0.0
    %1804 = vmatpush1.msra.mxu0 0.0
    %1805 = vmatprep.subr.mxu0 0.0
    %1806 = vmatpush1.msra.mxu0 0.0
    %1807 = vmatprep.subr.mxu0 0.0
    %1808 = vmatpush1.msra.mxu0 0.0
    %1809 = vmatprep.subr.mxu0 0.0
    %1810 = vmatpush1.msra.mxu0 0.0
    %1811 = vmatprep.subr.mxu0 0.0
    %1812 = vmatpush1.msra.mxu0 0.0
    %1813 = vmatprep.subr.mxu0 0.0
    %1814 = vmatpush1.msra.mxu0 0.0
    %1815 = vmatprep.subr.mxu0 0.0
    %1816 = vmatpush1.msra.mxu0 0.0
    %1817 = vmatprep.subr.mxu0 0.0
    %1818 = vmatpush1.msra.mxu0 0.0
    %1819 = vmatprep.subr.mxu0 0.0
    %1820 = vmatpush1.msra.mxu0 0.0
    %1821 = vmatprep.subr.mxu0 0.0
    %1822 = vmatpush1.msra.mxu0 0.0
    %1823 = vmatprep.subr.mxu0 0.0
    %1824 = vmatpush1.msra.mxu0 0.0
    %1825 = vmatprep.subr.mxu0 0.0
    %1826 = vmatpush1.msra.mxu0 0.0
    %1827 = vmatprep.subr.mxu0 0.0
    %1828 = vmatpush1.msra.mxu0 0.0
    %1829 = vmatprep.subr.mxu0 0.0
    %1830 = vmatpush1.msra.mxu0 0.0
    %1831 = vmatprep.subr.mxu0 0.0
    %1832 = vmatpush1.msra.mxu0 0.0
    %1833 = vmatprep.subr.mxu0 0.0
    %1834 = vmatpush1.msra.mxu0 0.0
    %1835 = vmatprep.subr.mxu0 0.0
    %1836 = vmatpush1.msra.mxu0 0.0
    %1837 = vmatprep.subr.mxu0 0.0
    %1838 = vmatpush1.msra.mxu0 0.0
    %1839 = vmatprep.subr.mxu0 0.0
    %1840 = vmatpush1.msra.mxu0 0.0
    %1841 = vmatprep.subr.mxu0 0.0
    %1842 = vmatpush1.msra.mxu0 0.0
    %1843 = vmatprep.subr.mxu0 0.0
    %1844 = vmatpush1.msra.mxu0 0.0
    %1845 = vmatprep.subr.mxu0 0.0
    %1846 = vmatpush1.msra.mxu0 0.0
    %1847 = vmatprep.subr.mxu0 0.0
    %1848 = vmatpush1.msra.mxu0 0.0
    %1849 = vmatprep.subr.mxu0 0.0
    %1850 = vmatpush1.msra.mxu0 0.0
    %1851 = vmatprep.subr.mxu0 0.0
    %1852 = vmatpush1.msra.mxu0 0.0
    %1853 = vmatprep.mubr.f32.mxu0 0.0
    %1854 = vmatmul.mubr.f32.gmra.mrb[0].mxu0 %v349
    %v1855 = vpop.f32.mrb[0].mxu0
    %v1856 = vadd.f32 0.0, %v1855
    %v1857 = vpop.f32.mrb[0].mxu0
    %1858 = vdwg.mxu0
    %v1859 = vadd.f32 %v1780, %v1788
    %v1860 = vmul.f32 %v1856, 2.0
    %v1861 = vsub.f32 %v1859, %v1860
    %v1862 = vmax.f32 %v1861, 0.0
    %v1863 = vadd.f32 %v1862, 1.0
    %v1864 = vrcp.pop %v1863
    %v1865 = vmul.f32 1.0, %v1864
    %v1866 = vsel %vm1546, %v1865, 0.0
    %1867 = vadd.xlane.f32.xlu0 %v1866
    %v1868 = vpop.xlane.xlu0 %1867
    %v1869 = vrcp.pop %v1868
    %v1870 = vmul.f32 %v1865, %v1869
    %1871 = vst.msk [vmem:[%s26] sm:$0xff] %vm1546, %v1870
    // Predicated region
    $region102: #{tpu_custom_call.1} parent=1 // pred_check
      _
    $region103: #{tpu_custom_call.1} parent=1 // pred_check_branch
      %1873 = sbr.rel (0) target = $region105
    $region104: #{tpu_custom_call.1} parent=1 // pred_region
      %s1875 = ssub.s32 128, 128
      %1876 = vsyncadd [#allocation3], %s1875
      %s1878 = sshll.u32 [#allocation2], 4
      %s1879 = int_to_ptr.vmem [resolvable:$true] %s1878
      %1881 = dma.vmem_to_hbm [thread:$0]  %s1879, 128, %s25, [#allocation3]
    $region105: #{tpu_custom_call.1} parent=1 // pred_fallthru
      _
    // Predicated region
    $region106: #{tpu_custom_call.1} parent=1 // pred_check
      _
    $region107: #{tpu_custom_call.1} parent=1 // pred_check_branch
      %1883 = sbr.rel (0) target = $region109
    $region108: #{tpu_custom_call.1} parent=1 // pred_region
      _
    $region109: #{tpu_custom_call.1} parent=1 // pred_fallthru
      _
    // Predicated region
    $region110: #{tpu_custom_call.1} parent=1 // pred_check
      _
    $region111: #{tpu_custom_call.1} parent=1 // pred_check_branch
      %1885 = sbr.rel (0) target = $region113
    $region112: #{tpu_custom_call.1} parent=1 // pred_region
      _
    $region113: #{tpu_custom_call.1} parent=1 // pred_fallthru
      _
    // Predicated region
    $region114: #{tpu_custom_call.1} parent=1 // pred_check
      _
    $region115: #{tpu_custom_call.1} parent=1 // pred_check_branch
      %1887 = sbr.rel (0) target = $region117
    $region116: #{tpu_custom_call.1} parent=1 // pred_region
      %s1889 = ssub.s32 128, 128
      %1890 = vsyncadd [#allocation5], %s1889
      %s1892 = sshll.u32 [#allocation4], 4
      %s1893 = int_to_ptr.vmem [resolvable:$true] %s1892
      %1895 = dma.vmem_to_hbm [thread:$0]  %s1893, 128, %s28, [#allocation5]
    $region117: #{tpu_custom_call.1} parent=1 // pred_fallthru
      _
    // Predicated region
    $region118: #{tpu_custom_call.1} parent=1 // pred_check
      _
    $region119: #{tpu_custom_call.1} parent=1 // pred_check_branch
      %1897 = sbr.rel (0) target = $region121
    $region120: #{tpu_custom_call.1} parent=1 // pred_region
      %1898 = dma.done [#allocation3], 128
    $region121: #{tpu_custom_call.1} parent=1 // pred_fallthru
      _
    // Predicated region
    $region122: #{tpu_custom_call.1} parent=1 // pred_check
      _
    $region123: #{tpu_custom_call.1} parent=1 // pred_check_branch
      %1900 = sbr.rel (0) target = $region125
    $region124: #{tpu_custom_call.1} parent=1 // pred_region
      _
    $region125: #{tpu_custom_call.1} parent=1 // pred_fallthru
      _
    // Predicated region
    $region126: #{tpu_custom_call.1} parent=1 // pred_check
      _
    $region127: #{tpu_custom_call.1} parent=1 // pred_check_branch
      %1902 = sbr.rel (0) target = $region129
    $region128: #{tpu_custom_call.1} parent=1 // pred_region
      _
    $region129: #{tpu_custom_call.1} parent=1 // pred_fallthru
      _
    // Predicated region
    $region130: #{tpu_custom_call.1} parent=1 // pred_check
      _
    $region131: #{tpu_custom_call.1} parent=1 // pred_check_branch
      %1904 = sbr.rel (0) target = $region133
    $region132: #{tpu_custom_call.1} parent=1 // pred_region
      %1905 = dma.done [#allocation5], 128
    $region133: #{tpu_custom_call.1} parent=1 // pred_fallthru
      _
    %1906 = vsyncpa [#allocation3], 1
    %1907 = vsyncpa [#allocation5], 1

</llo_original>
